<compile_context>
chip_gen: v6e
topology: v6e:2x2x1
jax: 0.10.0
libtpu: 0.0.40
codegen_flags: <defaults>
</compile_context>

<pallas_src>
import jax
import jax.numpy as jnp
from jax.experimental import pallas as pl
from jax.experimental.pallas import tpu as pltpu


def decoder_kernel(
    # scalar prefetch (SMEM)
    trg_ref,       # (T, B) int32 — token ids for every step
    # inputs (all VMEM, constant index_map => resident across the whole T grid)
    hidden0_ref,   # (B, H)  f32   initial decoder hidden state
    enc_ref,       # (S, B, 2E) f32  encoder outputs, encoder-native layout
    mask_ref,      # (B, S)  f32   (1 = valid, 0 = pad)
    emb_ref,       # (V, Emb)
    attn_w_ref,    # (H + 2E, H)   rows [hidden-block ; encoder-block]
    attn_vec_ref,  # (2, H)        rows [attn bias ; v]
    w_ih_ref,      # (Emb + 2E, 3H) rows [embedded ; weighted], cols [r|z|n]
    w_hh_ref,      # (H, 3H)        cols [r|z|n]
    gru_b_ref,     # (2, 3H)        rows [b_ih ; b_hh]
    fc_w_ref,      # (H + 2E + Emb, O) rows [gru-out ; weighted ; embedded]
    fc_b_ref,      # (1, O)
    # outputs
    pred_ref,      # (1, B, O)  this step's prediction block
    hid_out_ref,   # (B, H)     final hidden state (resident accumulator)
    attn_out_ref,  # (1, B, S)  this step's attention block
    # scratch
    h_scr,         # (B, H)  f32   hidden state carried across timesteps
    emb_scr,       # (B, Emb) f32  gathered embedding rows
):
    t = pl.program_id(0)
    B, H = hidden0_ref.shape
    V, EMB = emb_ref.shape
    E2 = enc_ref.shape[2]

    @pl.when(t == 0)
    def _():
        h_scr[...] = hidden0_ref[...]

    hidden = h_scr[...]                                       # (B, H)
    enc = enc_ref[...]                                        # (S, B, 2E)

    # ---- embedding: row gather into VMEM scratch (dropout == identity / eval) ---
    for b in range(B):
        idx = jnp.clip(trg_ref[t, b], 0, V - 1)               # clamp untrusted ids
        emb_scr[b:b + 1, :] = emb_ref[pl.ds(idx, 1), :]
    embedded = emb_scr[...]                                   # (B, Emb)

    # ---- attention (decomposed; hidden projected once) --------------------------
    w_h = attn_w_ref[:H, :]                                   # (H, H)   static slice
    w_enc = attn_w_ref[H:, :]                                 # (2E, H)
    attn_b = attn_vec_ref[0:1, :]                             # (1, H)
    v = attn_vec_ref[1:2, :]                                  # (1, H)

    enc_proj = jnp.einsum('sbe,eh->sbh', enc, w_enc,
                          preferred_element_type=jnp.float32)  # (S, B, H)
    h_proj = jnp.dot(hidden, w_h,
                     preferred_element_type=jnp.float32) + attn_b         # (B, H)
    energy = jnp.tanh(enc_proj + h_proj[None, :, :])                      # (S, B, H)
    scores = jnp.sum(energy * v[None, :, :], axis=-1)                     # (S, B)

    mask_sb = mask_ref[...].T                                             # (S, B)
    scores = jnp.where(mask_sb == 0.0, jnp.float32(-1e10), scores)

    m = jnp.max(scores, axis=0, keepdims=True)                            # (1, B)
    e = jnp.exp(scores - m)
    denom = jnp.sum(e, axis=0, keepdims=True)                             # (1, B)
    a = e * pl.reciprocal(denom)                                          # (S, B)
    attn_out_ref[...] = a.T[None, :, :]                                   # (1, B, S)

    weighted = jnp.sum(a[:, :, None] * enc, axis=0)                       # (B, 2E)

    # ---- single GRU step: 3 fused matmuls (gate order [r, z, n]) ----------------
    w_ie = w_ih_ref[:EMB, :]                                  # (Emb, 3H)
    w_iw = w_ih_ref[EMB:, :]                                  # (2E, 3H)
    b_ih = gru_b_ref[0:1, :]                                  # (1, 3H)
    b_hh = gru_b_ref[1:2, :]                                  # (1, 3H)

    gx = (jnp.dot(embedded, w_ie, preferred_element_type=jnp.float32)
          + jnp.dot(weighted, w_iw, preferred_element_type=jnp.float32)
          + b_ih)                                             # (B, 3H)
    gh = jnp.dot(hidden, w_hh_ref[...],
                 preferred_element_type=jnp.float32) + b_hh   # (B, 3H)

    r = jax.nn.sigmoid(gx[:, :H] + gh[:, :H])
    z = jax.nn.sigmoid(gx[:, H:2 * H] + gh[:, H:2 * H])
    n = jnp.tanh(gx[:, 2 * H:] + r * gh[:, 2 * H:])
    h_new = (1.0 - z) * n + z * hidden                        # (B, H)

    h_scr[...] = h_new                                        # carry to step t+1
    hid_out_ref[...] = h_new                                  # final writeback at grid end

    # ---- output projection: decomposed fc, packed weight block ------------------
    fc_wh = fc_w_ref[:H, :]
    fc_ww = fc_w_ref[H:H + E2, :]
    fc_we = fc_w_ref[H + E2:, :]
    pred = (jnp.dot(h_new, fc_wh, preferred_element_type=jnp.float32)
            + jnp.dot(weighted, fc_ww, preferred_element_type=jnp.float32)
            + jnp.dot(embedded, fc_we, preferred_element_type=jnp.float32)
            + fc_b_ref[...])                                  # (B, O)
    pred_ref[...] = pred[None, :, :]


def prepare_params(raw):
    """Pack the PyTorch-style params into the few lane/sublane-friendly buffers the
    kernel expects (done once, outside the hot path)."""
    return {
        'emb':      raw['emb'],                               # (V, Emb)
        'attn_w':   raw['attn_w'],                            # (H + 2E, H)
        'attn_vec': jnp.stack([raw['attn_b'], raw['v']]),     # (2, H)
        'w_ih':     raw['w_ih'],                              # (Emb + 2E, 3H)
        'w_hh':     raw['w_hh'],                              # (H, 3H)
        'gru_b':    jnp.stack([raw['b_ih'], raw['b_hh']]),    # (2, 3H)
        'fc_w':     raw['fc_w'],                              # (H + 2E + Emb, O)
        'fc_b':     raw['fc_b'].reshape(1, -1),               # (1, O)
    }


@jax.jit
def decoder_decode(trg_seq, hidden, encoder_outputs, mask, kp):
    """Run T teacher-forced decoder steps in ONE pallas_call.
    trg_seq: (T, B) int; hidden: (B, H); encoder_outputs: (S, B, 2*enc_hid);
    mask: (B, S).  Returns (pred (T,B,O), final hidden (B,H), attn (T,B,S))."""
    T, B = trg_seq.shape
    _, H = hidden.shape
    S = encoder_outputs.shape[0]
    O = kp['fc_b'].shape[1]
    EMB = kp['emb'].shape[1]

    def whole(arr):  # full-array block, resident across the whole T grid
        nd = arr.ndim
        return pl.BlockSpec(tuple(arr.shape), lambda t, trg: (0,) * nd)

    grid_spec = pltpu.PrefetchScalarGridSpec(
        num_scalar_prefetch=1,                       # trg_seq -> SMEM
        grid=(T,),
        in_specs=[
            whole(hidden),
            whole(encoder_outputs),                  # stays (S, B, 2E): no HBM transpose
            whole(mask),                             # stays (B, S): transposed in-kernel
            whole(kp['emb']),
            whole(kp['attn_w']),
            whole(kp['attn_vec']),
            whole(kp['w_ih']),
            whole(kp['w_hh']),
            whole(kp['gru_b']),
            whole(kp['fc_w']),
            whole(kp['fc_b']),
        ],
        out_specs=(
            pl.BlockSpec((1, B, O), lambda t, trg: (t, 0, 0)),   # per-step prediction
            pl.BlockSpec((B, H),    lambda t, trg: (0, 0)),      # final hidden (resident)
            pl.BlockSpec((1, B, S), lambda t, trg: (t, 0, 0)),   # per-step attention
        ),
        scratch_shapes=[
            pltpu.VMEM((B, H), jnp.float32),     # carried hidden state
            pltpu.VMEM((B, EMB), jnp.float32),   # gathered embeddings
        ],
    )
    out_shape = (
        jax.ShapeDtypeStruct((T, B, O), jnp.float32),
        jax.ShapeDtypeStruct((B, H), jnp.float32),
        jax.ShapeDtypeStruct((T, B, S), jnp.float32),
    )
    pred, h_fin, attn = pl.pallas_call(
        decoder_kernel,
        out_shape=out_shape,
        grid_spec=grid_spec,
        compiler_params=pltpu.CompilerParams(
            dimension_semantics=("arbitrary",)),     # hidden carried step -> step
    )(trg_seq.astype(jnp.int32), hidden, encoder_outputs,
      mask.astype(jnp.float32),
      kp['emb'], kp['attn_w'], kp['attn_vec'], kp['w_ih'], kp['w_hh'],
      kp['gru_b'], kp['fc_w'], kp['fc_b'])
    return pred, h_fin, attn


def decoder_forward(trg, hidden, encoder_outputs, mask, kp):
    """Single decoder step — exactly the PyTorch module's forward (T == 1)."""
    pred, h_new, attn = decoder_decode(trg[None, :], hidden, encoder_outputs, mask, kp)
    return pred[0], h_new, attn[0]


def decoder_reference(trg, hidden, encoder_outputs, mask, raw):
    """Pure-JAX reference for ONE step, mirroring the PyTorch module (eval mode)."""
    B, H = hidden.shape
    S = encoder_outputs.shape[0]
    emb = raw['emb'][trg]                                       # (B, Emb)
    enc = jnp.transpose(encoder_outputs, (1, 0, 2))             # (B, S, 2E)
    hid_rep = jnp.repeat(hidden[:, None, :], S, axis=1)
    energy = jnp.tanh(jnp.concatenate([hid_rep, enc], -1) @ raw['attn_w']
                      + raw['attn_b'])
    scores = energy @ raw['v']                                  # (B, S)
    scores = jnp.where(mask == 0.0, -1e10, scores)
    a = jax.nn.softmax(scores, axis=1)
    weighted = jnp.einsum('bs,bse->be', a, enc)
    x = jnp.concatenate([emb, weighted], -1)
    gx = x @ raw['w_ih'] + raw['b_ih']
    gh = hidden @ raw['w_hh'] + raw['b_hh']
    r = jax.nn.sigmoid(gx[:, :H] + gh[:, :H])
    z = jax.nn.sigmoid(gx[:, H:2 * H] + gh[:, H:2 * H])
    n = jnp.tanh(gx[:, 2 * H:] + r * gh[:, 2 * H:])
    h_new = (1 - z) * n + z * hidden
    pred = jnp.concatenate([h_new, weighted, emb], -1) @ raw['fc_w'] + raw['fc_b']
    return pred, h_new, a


if __name__ == "__main__":
    # small, module-consistent shapes
    B = 4            # batch
    S = 8            # src_len
    V = 32           # input_dim (vocab)
    O = 32           # output_dim
    E = 16           # emb_dim
    ENC_H = 16       # enc_hid_dim -> encoder outputs have 2*ENC_H = 32 features
    H = 32           # dec_hid_dim
    T = 5            # decode steps (teacher-forced), fused into one pallas_call

    key = jax.random.PRNGKey(0)
    ks = jax.random.split(key, 16)

    # PyTorch-equivalent params (stored pre-transposed so y = x @ W + b).
    raw = {
        'emb':    0.1 * jax.random.normal(ks[0], (V, E), jnp.float32),
        # attention: Linear(dec_hid + 2*enc_hid -> dec_hid), cat order [hidden; enc]
        'attn_w': 0.1 * jax.random.normal(ks[1], (H + 2 * ENC_H, H), jnp.float32),
        'attn_b': 0.1 * jax.random.normal(ks[2], (H,), jnp.float32),
        'v':      0.1 * jax.random.normal(ks[3], (H,), jnp.float32),
        # GRU(emb + 2*enc_hid -> dec_hid); rows [embedded; weighted], cols [r|z|n]
        'w_ih':   0.1 * jax.random.normal(ks[4], (E + 2 * ENC_H, 3 * H), jnp.float32),
        'w_hh':   0.1 * jax.random.normal(ks[5], (H, 3 * H), jnp.float32),
        'b_ih':   0.1 * jax.random.normal(ks[6], (3 * H,), jnp.float32),
        'b_hh':   0.1 * jax.random.normal(ks[7], (3 * H,), jnp.float32),
        # fc: Linear(dec_hid + 2*enc_hid + emb -> output_dim); rows [output; weighted; embedded]
        'fc_w':   0.1 * jax.random.normal(ks[8], (H + 2 * ENC_H + E, O), jnp.float32),
        'fc_b':   0.1 * jax.random.normal(ks[9], (O,), jnp.float32),
    }
    kp = prepare_params(raw)

    trg_seq = jax.random.randint(ks[10], (T, B), 0, V, dtype=jnp.int32)
    hidden = jax.random.normal(ks[11], (B, H), jnp.float32)
    encoder_outputs = jax.random.normal(ks[12], (S, B, 2 * ENC_H), jnp.float32)
    lens = jnp.array([S, 5, 7, 3], dtype=jnp.int32)
    mask = (jnp.arange(S)[None, :] < lens[:, None]).astype(jnp.float32)   # (B, S)

    # fused multi-step decode (weights resident, hidden carried in VMEM scratch)
    pred, h_fin, attn = jax.block_until_ready(
        decoder_decode(trg_seq, hidden, encoder_outputs, mask, kp))

    # reference: T single-step calls with hidden threaded through
    h_ref = hidden
    preds_r, attns_r = [], []
    for t in range(T):
        p_r, h_ref, a_r = decoder_reference(trg_seq[t], h_ref, encoder_outputs, mask, raw)
        preds_r.append(p_r)
        attns_r.append(a_r)
    pred_r = jnp.stack(preds_r)
    attn_r = jnp.stack(attns_r)

    assert jnp.allclose(pred, pred_r, rtol=1e-4, atol=1e-4)
    assert jnp.allclose(h_fin, h_ref, rtol=1e-4, atol=1e-4)
    assert jnp.allclose(attn, attn_r, rtol=1e-4, atol=1e-4)

    # single-step path (the module's exact forward signature)
    p1, h1, a1 = jax.block_until_ready(
        decoder_forward(trg_seq[0], hidden, encoder_outputs, mask, kp))
    p1_r, h1_r, a1_r = decoder_reference(trg_seq[0], hidden, encoder_outputs, mask, raw)
    assert jnp.allclose(p1, p1_r, rtol=1e-4, atol=1e-4)
    assert jnp.allclose(h1, h1_r, rtol=1e-4, atol=1e-4)
    assert jnp.allclose(a1, a1_r, rtol=1e-4, atol=1e-4)

    print("KERNEL_OK")
</pallas_src>

<mosaic_0001>
module attributes {stable_mosaic.version = 11 : i64} {
  func.func @decoder_kernel(%arg0: i32, %arg1: memref<5x4xi32, #tpu.memory_space<smem>>, %arg2: memref<4x32xf32, #tpu.memory_space<vmem>>, %arg3: memref<8x4x32xf32, #tpu.memory_space<vmem>>, %arg4: memref<4x8xf32, #tpu.memory_space<vmem>>, %arg5: memref<32x16xf32, #tpu.memory_space<vmem>>, %arg6: memref<64x32xf32, #tpu.memory_space<vmem>>, %arg7: memref<2x32xf32, #tpu.memory_space<vmem>>, %arg8: memref<48x96xf32, #tpu.memory_space<vmem>>, %arg9: memref<32x96xf32, #tpu.memory_space<vmem>>, %arg10: memref<2x96xf32, #tpu.memory_space<vmem>>, %arg11: memref<80x32xf32, #tpu.memory_space<vmem>>, %arg12: memref<1x32xf32, #tpu.memory_space<vmem>>, %arg13: memref<1x4x32xf32, #tpu.memory_space<vmem>>, %arg14: memref<4x32xf32, #tpu.memory_space<vmem>>, %arg15: memref<1x4x8xf32, #tpu.memory_space<vmem>>, %arg16: memref<4x32xf32, #tpu.memory_space<vmem>>, %arg17: memref<4x16xf32, #tpu.memory_space<vmem>>) attributes {dimension_semantics = [#tpu.dimension_semantics<arbitrary>], iteration_bounds = array<i64: 5>, scalar_prefetch = 1 : i64, scratch_operands = 2 : i64, tpu.core_type = #tpu.core_type<tc>, window_params = [{pipeline_mode = #tpu.pipeline_mode<synchronous>, transform_indices = @transform_0, window_bounds = array<i64: 4, 32>}, {pipeline_mode = #tpu.pipeline_mode<synchronous>, transform_indices = @transform_1, window_bounds = array<i64: 8, 4, 32>}, {pipeline_mode = #tpu.pipeline_mode<synchronous>, transform_indices = @transform_2, window_bounds = array<i64: 4, 8>}, {pipeline_mode = #tpu.pipeline_mode<synchronous>, transform_indices = @transform_3, window_bounds = array<i64: 32, 16>}, {pipeline_mode = #tpu.pipeline_mode<synchronous>, transform_indices = @transform_4, window_bounds = array<i64: 64, 32>}, {pipeline_mode = #tpu.pipeline_mode<synchronous>, transform_indices = @transform_5, window_bounds = array<i64: 2, 32>}, {pipeline_mode = #tpu.pipeline_mode<synchronous>, transform_indices = @transform_6, window_bounds = array<i64: 48, 96>}, {pipeline_mode = #tpu.pipeline_mode<synchronous>, transform_indices = @transform_7, window_bounds = array<i64: 32, 96>}, {pipeline_mode = #tpu.pipeline_mode<synchronous>, transform_indices = @transform_8, window_bounds = array<i64: 2, 96>}, {pipeline_mode = #tpu.pipeline_mode<synchronous>, transform_indices = @transform_9, window_bounds = array<i64: 80, 32>}, {pipeline_mode = #tpu.pipeline_mode<synchronous>, transform_indices = @transform_10, window_bounds = array<i64: 1, 32>}, {transform_indices = @transform_11, window_bounds = array<i64: 1, 4, 32>}, {pipeline_mode = #tpu.pipeline_mode<synchronous>, transform_indices = @transform_12, window_bounds = array<i64: 4, 32>}, {transform_indices = @transform_13, window_bounds = array<i64: 1, 4, 8>}]} {
    %c0_i32 = arith.constant 0 : i32
    %0 = arith.cmpi eq, %arg0, %c0_i32 : i32
    %1 = arith.extui %0 : i1 to i32
    %c0_i32_0 = arith.constant 0 : i32
    %2 = arith.cmpi ne, %1, %c0_i32_0 : i32
    scf.if %2 {
      %c0_78 = arith.constant 0 : index
      %c0_79 = arith.constant 0 : index
      %127 = vector.load %arg2[%c0_78, %c0_79] : memref<4x32xf32, #tpu.memory_space<vmem>>, vector<4x32xf32>
      %c0_80 = arith.constant 0 : index
      %c0_81 = arith.constant 0 : index
      %128 = vector.load %arg16[%c0_80, %c0_81] : memref<4x32xf32, #tpu.memory_space<vmem>>, vector<4x32xf32>
      tpu.vector_store %arg16[%c0_80, %c0_81], %127 {strides = array<i32>} : memref<4x32xf32, #tpu.memory_space<vmem>>, vector<4x32xf32>,
    } else {
    }
    %c0 = arith.constant 0 : index
    %c0_1 = arith.constant 0 : index
    %3 = vector.load %arg16[%c0, %c0_1] : memref<4x32xf32, #tpu.memory_space<vmem>>, vector<4x32xf32>
    %c0_2 = arith.constant 0 : index
    %c0_3 = arith.constant 0 : index
    %c0_4 = arith.constant 0 : index
    %4 = vector.load %arg3[%c0_2, %c0_3, %c0_4] : memref<8x4x32xf32, #tpu.memory_space<vmem>>, vector<8x4x32xf32>
    %5 = arith.index_cast %arg0 : i32 to index
    %c0_5 = arith.constant 0 : index
    %6 = memref.load %arg1[%5, %c0_5] : memref<5x4xi32, #tpu.memory_space<smem>>
    %c0_i32_6 = arith.constant 0 : i32
    %c31_i32 = arith.constant 31 : i32
    %7 = arith.maxsi %c0_i32_6, %6 : i32
    %8 = arith.minsi %c31_i32, %7 : i32
    %9 = arith.index_cast %8 : i32 to index
    %c0_7 = arith.constant 0 : index
    %10 = vector.load %arg5[%9, %c0_7] : memref<32x16xf32, #tpu.memory_space<vmem>>, vector<1x16xf32>
    %c0_8 = arith.constant 0 : index
    %c0_9 = arith.constant 0 : index
    %11 = vector.load %arg17[%c0_8, %c0_9] : memref<4x16xf32, #tpu.memory_space<vmem>>, vector<1x16xf32>
    tpu.vector_store %arg17[%c0_8, %c0_9], %10 {strides = array<i32>} : memref<4x16xf32, #tpu.memory_space<vmem>>, vector<1x16xf32>,
    %12 = arith.index_cast %arg0 : i32 to index
    %c1 = arith.constant 1 : index
    %13 = memref.load %arg1[%12, %c1] : memref<5x4xi32, #tpu.memory_space<smem>>
    %c0_i32_10 = arith.constant 0 : i32
    %c31_i32_11 = arith.constant 31 : i32
    %14 = arith.maxsi %c0_i32_10, %13 : i32
    %15 = arith.minsi %c31_i32_11, %14 : i32
    %16 = arith.index_cast %15 : i32 to index
    %c0_12 = arith.constant 0 : index
    %17 = vector.load %arg5[%16, %c0_12] : memref<32x16xf32, #tpu.memory_space<vmem>>, vector<1x16xf32>
    %c1_13 = arith.constant 1 : index
    %c0_14 = arith.constant 0 : index
    %18 = vector.load %arg17[%c1_13, %c0_14] : memref<4x16xf32, #tpu.memory_space<vmem>>, vector<1x16xf32>
    tpu.vector_store %arg17[%c1_13, %c0_14], %17 {strides = array<i32>} : memref<4x16xf32, #tpu.memory_space<vmem>>, vector<1x16xf32>,
    %19 = arith.index_cast %arg0 : i32 to index
    %c2 = arith.constant 2 : index
    %20 = memref.load %arg1[%19, %c2] : memref<5x4xi32, #tpu.memory_space<smem>>
    %c0_i32_15 = arith.constant 0 : i32
    %c31_i32_16 = arith.constant 31 : i32
    %21 = arith.maxsi %c0_i32_15, %20 : i32
    %22 = arith.minsi %c31_i32_16, %21 : i32
    %23 = arith.index_cast %22 : i32 to index
    %c0_17 = arith.constant 0 : index
    %24 = vector.load %arg5[%23, %c0_17] : memref<32x16xf32, #tpu.memory_space<vmem>>, vector<1x16xf32>
    %c2_18 = arith.constant 2 : index
    %c0_19 = arith.constant 0 : index
    %25 = vector.load %arg17[%c2_18, %c0_19] : memref<4x16xf32, #tpu.memory_space<vmem>>, vector<1x16xf32>
    tpu.vector_store %arg17[%c2_18, %c0_19], %24 {strides = array<i32>} : memref<4x16xf32, #tpu.memory_space<vmem>>, vector<1x16xf32>,
    %26 = arith.index_cast %arg0 : i32 to index
    %c3 = arith.constant 3 : index
    %27 = memref.load %arg1[%26, %c3] : memref<5x4xi32, #tpu.memory_space<smem>>
    %c0_i32_20 = arith.constant 0 : i32
    %c31_i32_21 = arith.constant 31 : i32
    %28 = arith.maxsi %c0_i32_20, %27 : i32
    %29 = arith.minsi %c31_i32_21, %28 : i32
    %30 = arith.index_cast %29 : i32 to index
    %c0_22 = arith.constant 0 : index
    %31 = vector.load %arg5[%30, %c0_22] : memref<32x16xf32, #tpu.memory_space<vmem>>, vector<1x16xf32>
    %c3_23 = arith.constant 3 : index
    %c0_24 = arith.constant 0 : index
    %32 = vector.load %arg17[%c3_23, %c0_24] : memref<4x16xf32, #tpu.memory_space<vmem>>, vector<1x16xf32>
    tpu.vector_store %arg17[%c3_23, %c0_24], %31 {strides = array<i32>} : memref<4x16xf32, #tpu.memory_space<vmem>>, vector<1x16xf32>,
    %c0_25 = arith.constant 0 : index
    %c0_26 = arith.constant 0 : index
    %33 = vector.load %arg17[%c0_25, %c0_26] : memref<4x16xf32, #tpu.memory_space<vmem>>, vector<4x16xf32>
    %c0_27 = arith.constant 0 : index
    %c0_28 = arith.constant 0 : index
    %34 = vector.load %arg6[%c0_27, %c0_28] : memref<64x32xf32, #tpu.memory_space<vmem>>, vector<32x32xf32>
    %c32 = arith.constant 32 : index
    %c0_29 = arith.constant 0 : index
    %35 = vector.load %arg6[%c32, %c0_29] : memref<64x32xf32, #tpu.memory_space<vmem>>, vector<32x32xf32>
    %c0_30 = arith.constant 0 : index
    %c0_31 = arith.constant 0 : index
    %36 = vector.load %arg7[%c0_30, %c0_31] : memref<2x32xf32, #tpu.memory_space<vmem>>, vector<1x32xf32>
    %c1_32 = arith.constant 1 : index
    %c0_33 = arith.constant 0 : index
    %37 = vector.load %arg7[%c1_32, %c0_33] : memref<2x32xf32, #tpu.memory_space<vmem>>, vector<1x32xf32>
    "tpu.trace_start"() <{level = 10 : i32, message = "sbe,eh->sbh"}> : () -> ()
    %cst = arith.constant dense<0.000000e+00> : vector<8x4x32xf32>
    %38 = tpu.matmul %4, %35, %cst {dimension_numbers = #tpu.dot_dimension_numbers<[2], [0], [0, 1], [1], [0, 0, 0, 1, 1, 1], [], []>} : vector<8x4x32xf32>, vector<32x32xf32>, vector<8x4x32xf32> -> vector<8x4x32xf32>
    "tpu.trace_stop"() : () -> ()
    %cst_34 = arith.constant dense<0.000000e+00> : vector<4x32xf32>
    %39 = tpu.matmul %3, %34, %cst_34 {dimension_numbers = #tpu.dot_dimension_numbers<[1], [0], [0], [1], [0, 0, 1, 1], [], []>} : vector<4x32xf32>, vector<32x32xf32>, vector<4x32xf32> -> vector<4x32xf32>
    %40 = vector.broadcast %36 : vector<1x32xf32> to vector<4x32xf32>
    %41 = arith.addf %39, %40 : vector<4x32xf32>
    %42 = vector.shape_cast %41 : vector<4x32xf32> to vector<1x4x32xf32>
    %43 = vector.broadcast %42 : vector<1x4x32xf32> to vector<8x4x32xf32>
    %44 = arith.addf %38, %43 : vector<8x4x32xf32>
    %45 = math.tanh %44 : vector<8x4x32xf32>
    %46 = vector.shape_cast %37 : vector<1x32xf32> to vector<1x1x32xf32>
    %47 = vector.broadcast %46 : vector<1x1x32xf32> to vector<8x4x32xf32>
    %48 = arith.mulf %45, %47 : vector<8x4x32xf32>
    %cst_35 = arith.constant dense<0.000000e+00> : vector<8x4xf32>
    %49 = vector.multi_reduction <add>, %48, %cst_35 [2] : vector<8x4x32xf32> to vector<8x4xf32>
    %c0_36 = arith.constant 0 : index
    %c0_37 = arith.constant 0 : index
    %50 = vector.load %arg4[%c0_36, %c0_37] : memref<4x8xf32, #tpu.memory_space<vmem>>, vector<4x8xf32>
    %51 = tpu.transpose %50, [1, 0] : vector<4x8xf32> -> vector<8x4xf32>
    %cst_38 = arith.constant 0.000000e+00 : f32
    %52 = vector.broadcast %cst_38 : f32 to vector<8x4xf32>
    %53 = arith.cmpf oeq, %51, %52 : vector<8x4xf32>
    %cst_39 = arith.constant -1.000000e+10 : f32
    %54 = vector.broadcast %cst_39 : f32 to vector<8x4xf32>
    %55 = arith.select %53, %54, %49 : vector<8x4xi1>, vector<8x4xf32>
    %cst_40 = arith.constant dense<0xFF800000> : vector<4xf32>
    %56 = vector.multi_reduction <maximumf>, %55, %cst_40 [0] : vector<8x4xf32> to vector<4xf32>
    %57 = vector.shape_cast %56 : vector<4xf32> to vector<1x4xf32>
    %58 = vector.broadcast %57 : vector<1x4xf32> to vector<8x4xf32>
    %59 = arith.subf %55, %58 : vector<8x4xf32>
    %60 = math.exp %59 : vector<8x4xf32>
    %cst_41 = arith.constant dense<0.000000e+00> : vector<4xf32>
    %61 = vector.multi_reduction <add>, %60, %cst_41 [0] : vector<8x4xf32> to vector<4xf32>
    %62 = vector.shape_cast %61 : vector<4xf32> to vector<1x4xf32>
    %63 = tpu.reciprocal %62 : vector<1x4xf32> -> vector<1x4xf32>
    %64 = vector.broadcast %63 : vector<1x4xf32> to vector<8x4xf32>
    %65 = arith.mulf %60, %64 : vector<8x4xf32>
    %66 = tpu.transpose %65, [1, 0] : vector<8x4xf32> -> vector<4x8xf32>
    %67 = vector.shape_cast %66 : vector<4x8xf32> to vector<1x4x8xf32>
    %c0_42 = arith.constant 0 : index
    %c0_43 = arith.constant 0 : index
    %c0_44 = arith.constant 0 : index
    %68 = vector.load %arg15[%c0_42, %c0_43, %c0_44] : memref<1x4x8xf32, #tpu.memory_space<vmem>>, vector<1x4x8xf32>
    tpu.vector_store %arg15[%c0_42, %c0_43, %c0_44], %67 {strides = array<i32>} : memref<1x4x8xf32, #tpu.memory_space<vmem>>, vector<1x4x8xf32>,
    %69 = vector.shape_cast %65 : vector<8x4xf32> to vector<8x4x1xf32>
    %70 = vector.broadcast %69 : vector<8x4x1xf32> to vector<8x4x32xf32>
    %71 = arith.mulf %70, %4 : vector<8x4x32xf32>
    %cst_45 = arith.constant dense<0.000000e+00> : vector<4x32xf32>
    %72 = vector.multi_reduction <add>, %71, %cst_45 [0] : vector<8x4x32xf32> to vector<4x32xf32>
    %c0_46 = arith.constant 0 : index
    %c0_47 = arith.constant 0 : index
    %73 = vector.load %arg8[%c0_46, %c0_47] : memref<48x96xf32, #tpu.memory_space<vmem>>, vector<16x96xf32>
    %c16 = arith.constant 16 : index
    %c0_48 = arith.constant 0 : index
    %74 = vector.load %arg8[%c16, %c0_48] : memref<48x96xf32, #tpu.memory_space<vmem>>, vector<32x96xf32>
    %c0_49 = arith.constant 0 : index
    %c0_50 = arith.constant 0 : index
    %75 = vector.load %arg10[%c0_49, %c0_50] : memref<2x96xf32, #tpu.memory_space<vmem>>, vector<1x96xf32>
    %c1_51 = arith.constant 1 : index
    %c0_52 = arith.constant 0 : index
    %76 = vector.load %arg10[%c1_51, %c0_52] : memref<2x96xf32, #tpu.memory_space<vmem>>, vector<1x96xf32>
    %cst_53 = arith.constant dense<0.000000e+00> : vector<4x96xf32>
    %77 = tpu.matmul %33, %73, %cst_53 {dimension_numbers = #tpu.dot_dimension_numbers<[1], [0], [0], [1], [0, 0, 1, 1], [], []>} : vector<4x16xf32>, vector<16x96xf32>, vector<4x96xf32> -> vector<4x96xf32>
    %cst_54 = arith.constant dense<0.000000e+00> : vector<4x96xf32>
    %78 = tpu.matmul %72, %74, %cst_54 {dimension_numbers = #tpu.dot_dimension_numbers<[1], [0], [0], [1], [0, 0, 1, 1], [], []>} : vector<4x32xf32>, vector<32x96xf32>, vector<4x96xf32> -> vector<4x96xf32>
    %79 = arith.addf %77, %78 : vector<4x96xf32>
    %80 = vector.broadcast %75 : vector<1x96xf32> to vector<4x96xf32>
    %81 = arith.addf %79, %80 : vector<4x96xf32>
    %c0_55 = arith.constant 0 : index
    %c0_56 = arith.constant 0 : index
    %82 = vector.load %arg9[%c0_55, %c0_56] : memref<32x96xf32, #tpu.memory_space<vmem>>, vector<32x96xf32>
    %cst_57 = arith.constant dense<0.000000e+00> : vector<4x96xf32>
    %83 = tpu.matmul %3, %82, %cst_57 {dimension_numbers = #tpu.dot_dimension_numbers<[1], [0], [0], [1], [0, 0, 1, 1], [], []>} : vector<4x32xf32>, vector<32x96xf32>, vector<4x96xf32> -> vector<4x96xf32>
    %84 = vector.broadcast %76 : vector<1x96xf32> to vector<4x96xf32>
    %85 = arith.addf %83, %84 : vector<4x96xf32>
    %86 = vector.extract_strided_slice %81 {offsets = [0, 0], sizes = [4, 32], strides = [1, 1]} : vector<4x96xf32> to vector<4x32xf32>
    %87 = vector.extract_strided_slice %85 {offsets = [0, 0], sizes = [4, 32], strides = [1, 1]} : vector<4x96xf32> to vector<4x32xf32>
    %88 = arith.addf %86, %87 : vector<4x32xf32>
    %89 = arith.negf %88 : vector<4x32xf32>
    %90 = math.exp %89 : vector<4x32xf32>
    %cst_58 = arith.constant 1.000000e+00 : f32
    %91 = vector.broadcast %cst_58 : f32 to vector<4x32xf32>
    %92 = arith.addf %91, %90 : vector<4x32xf32>
    %93 = arith.divf %91, %92 : vector<4x32xf32>
    %94 = vector.extract_strided_slice %81 {offsets = [0, 32], sizes = [4, 32], strides = [1, 1]} : vector<4x96xf32> to vector<4x32xf32>
    %95 = vector.extract_strided_slice %85 {offsets = [0, 32], sizes = [4, 32], strides = [1, 1]} : vector<4x96xf32> to vector<4x32xf32>
    %96 = arith.addf %94, %95 : vector<4x32xf32>
    %97 = arith.negf %96 : vector<4x32xf32>
    %98 = math.exp %97 : vector<4x32xf32>
    %cst_59 = arith.constant 1.000000e+00 : f32
    %99 = vector.broadcast %cst_59 : f32 to vector<4x32xf32>
    %100 = arith.addf %99, %98 : vector<4x32xf32>
    %101 = arith.divf %99, %100 : vector<4x32xf32>
    %102 = vector.extract_strided_slice %81 {offsets = [0, 64], sizes = [4, 32], strides = [1, 1]} : vector<4x96xf32> to vector<4x32xf32>
    %103 = vector.extract_strided_slice %85 {offsets = [0, 64], sizes = [4, 32], strides = [1, 1]} : vector<4x96xf32> to vector<4x32xf32>
    %104 = arith.mulf %93, %103 : vector<4x32xf32>
    %105 = arith.addf %102, %104 : vector<4x32xf32>
    %106 = math.tanh %105 : vector<4x32xf32>
    %cst_60 = arith.constant 1.000000e+00 : f32
    %107 = vector.broadcast %cst_60 : f32 to vector<4x32xf32>
    %108 = arith.subf %107, %101 : vector<4x32xf32>
    %109 = arith.mulf %108, %106 : vector<4x32xf32>
    %110 = arith.mulf %101, %3 : vector<4x32xf32>
    %111 = arith.addf %109, %110 : vector<4x32xf32>
    %c0_61 = arith.constant 0 : index
    %c0_62 = arith.constant 0 : index
    %112 = vector.load %arg16[%c0_61, %c0_62] : memref<4x32xf32, #tpu.memory_space<vmem>>, vector<4x32xf32>
    tpu.vector_store %arg16[%c0_61, %c0_62], %111 {strides = array<i32>} : memref<4x32xf32, #tpu.memory_space<vmem>>, vector<4x32xf32>,
    %c0_63 = arith.constant 0 : index
    %c0_64 = arith.constant 0 : index
    %113 = vector.load %arg14[%c0_63, %c0_64] : memref<4x32xf32, #tpu.memory_space<vmem>>, vector<4x32xf32>
    tpu.vector_store %arg14[%c0_63, %c0_64], %111 {strides = array<i32>} : memref<4x32xf32, #tpu.memory_space<vmem>>, vector<4x32xf32>,
    %c0_65 = arith.constant 0 : index
    %c0_66 = arith.constant 0 : index
    %114 = vector.load %arg11[%c0_65, %c0_66] : memref<80x32xf32, #tpu.memory_space<vmem>>, vector<32x32xf32>
    %c32_67 = arith.constant 32 : index
    %c0_68 = arith.constant 0 : index
    %115 = vector.load %arg11[%c32_67, %c0_68] : memref<80x32xf32, #tpu.memory_space<vmem>>, vector<32x32xf32>
    %c64 = arith.constant 64 : index
    %c0_69 = arith.constant 0 : index
    %116 = vector.load %arg11[%c64, %c0_69] : memref<80x32xf32, #tpu.memory_space<vmem>>, vector<16x32xf32>
    %cst_70 = arith.constant dense<0.000000e+00> : vector<4x32xf32>
    %117 = tpu.matmul %111, %114, %cst_70 {dimension_numbers = #tpu.dot_dimension_numbers<[1], [0], [0], [1], [0, 0, 1, 1], [], []>} : vector<4x32xf32>, vector<32x32xf32>, vector<4x32xf32> -> vector<4x32xf32>
    %cst_71 = arith.constant dense<0.000000e+00> : vector<4x32xf32>
    %118 = tpu.matmul %72, %115, %cst_71 {dimension_numbers = #tpu.dot_dimension_numbers<[1], [0], [0], [1], [0, 0, 1, 1], [], []>} : vector<4x32xf32>, vector<32x32xf32>, vector<4x32xf32> -> vector<4x32xf32>
    %119 = arith.addf %117, %118 : vector<4x32xf32>
    %cst_72 = arith.constant dense<0.000000e+00> : vector<4x32xf32>
    %120 = tpu.matmul %33, %116, %cst_72 {dimension_numbers = #tpu.dot_dimension_numbers<[1], [0], [0], [1], [0, 0, 1, 1], [], []>} : vector<4x16xf32>, vector<16x32xf32>, vector<4x32xf32> -> vector<4x32xf32>
    %121 = arith.addf %119, %120 : vector<4x32xf32>
    %c0_73 = arith.constant 0 : index
    %c0_74 = arith.constant 0 : index
    %122 = vector.load %arg12[%c0_73, %c0_74] : memref<1x32xf32, #tpu.memory_space<vmem>>, vector<1x32xf32>
    %123 = vector.broadcast %122 : vector<1x32xf32> to vector<4x32xf32>
    %124 = arith.addf %121, %123 : vector<4x32xf32>
    %125 = vector.shape_cast %124 : vector<4x32xf32> to vector<1x4x32xf32>
    %c0_75 = arith.constant 0 : index
    %c0_76 = arith.constant 0 : index
    %c0_77 = arith.constant 0 : index
    %126 = vector.load %arg13[%c0_75, %c0_76, %c0_77] : memref<1x4x32xf32, #tpu.memory_space<vmem>>, vector<1x4x32xf32>
    tpu.vector_store %arg13[%c0_75, %c0_76, %c0_77], %125 {strides = array<i32>} : memref<1x4x32xf32, #tpu.memory_space<vmem>>, vector<1x4x32xf32>,
    return
  }
  func.func @transform_0(%arg0: i32, %arg1: memref<5x4xi32, #tpu.memory_space<smem>>) -> (i32, i32) {
    %c0_i32 = arith.constant 0 : i32
    %c0_i32_0 = arith.constant 0 : i32
    %c0_i32_1 = arith.constant 0 : i32
    return %c0_i32, %c0_i32_0 : i32, i32
  }
  func.func @transform_1(%arg0: i32, %arg1: memref<5x4xi32, #tpu.memory_space<smem>>) -> (i32, i32, i32) {
    %c0_i32 = arith.constant 0 : i32
    %c0_i32_0 = arith.constant 0 : i32
    %c0_i32_1 = arith.constant 0 : i32
    %c0_i32_2 = arith.constant 0 : i32
    return %c0_i32, %c0_i32_0, %c0_i32_1 : i32, i32, i32
  }
  func.func @transform_2(%arg0: i32, %arg1: memref<5x4xi32, #tpu.memory_space<smem>>) -> (i32, i32) {
    %c0_i32 = arith.constant 0 : i32
    %c0_i32_0 = arith.constant 0 : i32
    %c0_i32_1 = arith.constant 0 : i32
    return %c0_i32, %c0_i32_0 : i32, i32
  }
  func.func @transform_3(%arg0: i32, %arg1: memref<5x4xi32, #tpu.memory_space<smem>>) -> (i32, i32) {
    %c0_i32 = arith.constant 0 : i32
    %c0_i32_0 = arith.constant 0 : i32
    %c0_i32_1 = arith.constant 0 : i32
    return %c0_i32, %c0_i32_0 : i32, i32
  }
  func.func @transform_4(%arg0: i32, %arg1: memref<5x4xi32, #tpu.memory_space<smem>>) -> (i32, i32) {
    %c0_i32 = arith.constant 0 : i32
    %c0_i32_0 = arith.constant 0 : i32
    %c0_i32_1 = arith.constant 0 : i32
    return %c0_i32, %c0_i32_0 : i32, i32
  }
  func.func @transform_5(%arg0: i32, %arg1: memref<5x4xi32, #tpu.memory_space<smem>>) -> (i32, i32) {
    %c0_i32 = arith.constant 0 : i32
    %c0_i32_0 = arith.constant 0 : i32
    %c0_i32_1 = arith.constant 0 : i32
    return %c0_i32, %c0_i32_0 : i32, i32
  }
  func.func @transform_6(%arg0: i32, %arg1: memref<5x4xi32, #tpu.memory_space<smem>>) -> (i32, i32) {
    %c0_i32 = arith.constant 0 : i32
    %c0_i32_0 = arith.constant 0 : i32
    %c0_i32_1 = arith.constant 0 : i32
    return %c0_i32, %c0_i32_0 : i32, i32
  }
  func.func @transform_7(%arg0: i32, %arg1: memref<5x4xi32, #tpu.memory_space<smem>>) -> (i32, i32) {
    %c0_i32 = arith.constant 0 : i32
    %c0_i32_0 = arith.constant 0 : i32
    %c0_i32_1 = arith.constant 0 : i32
    return %c0_i32, %c0_i32_0 : i32, i32
  }
  func.func @transform_8(%arg0: i32, %arg1: memref<5x4xi32, #tpu.memory_space<smem>>) -> (i32, i32) {
    %c0_i32 = arith.constant 0 : i32
    %c0_i32_0 = arith.constant 0 : i32
    %c0_i32_1 = arith.constant 0 : i32
    return %c0_i32, %c0_i32_0 : i32, i32
  }
  func.func @transform_9(%arg0: i32, %arg1: memref<5x4xi32, #tpu.memory_space<smem>>) -> (i32, i32) {
    %c0_i32 = arith.constant 0 : i32
    %c0_i32_0 = arith.constant 0 : i32
    %c0_i32_1 = arith.constant 0 : i32
    return %c0_i32, %c0_i32_0 : i32, i32
  }
  func.func @transform_10(%arg0: i32, %arg1: memref<5x4xi32, #tpu.memory_space<smem>>) -> (i32, i32) {
    %c0_i32 = arith.constant 0 : i32
    %c0_i32_0 = arith.constant 0 : i32
    %c0_i32_1 = arith.constant 0 : i32
    return %c0_i32, %c0_i32_0 : i32, i32
  }
  func.func @transform_11(%arg0: i32, %arg1: memref<5x4xi32, #tpu.memory_space<smem>>) -> (i32, i32, i32) {
    %c0_i32 = arith.constant 0 : i32
    %c0_i32_0 = arith.constant 0 : i32
    %c0_i32_1 = arith.constant 0 : i32
    return %arg0, %c0_i32, %c0_i32_0 : i32, i32, i32
  }
  func.func @transform_12(%arg0: i32, %arg1: memref<5x4xi32, #tpu.memory_space<smem>>) -> (i32, i32) {
    %c0_i32 = arith.constant 0 : i32
    %c0_i32_0 = arith.constant 0 : i32
    %c0_i32_1 = arith.constant 0 : i32
    return %c0_i32, %c0_i32_0 : i32, i32
  }
  func.func @transform_13(%arg0: i32, %arg1: memref<5x4xi32, #tpu.memory_space<smem>>) -> (i32, i32, i32) {
    %c0_i32 = arith.constant 0 : i32
    %c0_i32_0 = arith.constant 0 : i32
    %c0_i32_1 = arith.constant 0 : i32
    return %arg0, %c0_i32, %c0_i32_0 : i32, i32, i32
  }
}

</mosaic_0001>

<llo_original>
// kernel: decoder_decode.1
$region0: #{decoder_decode.1}
  #allocation0 [shape = 'u32[]', space=smem, size = 0x4, offset = 0x4, fixed_abs, tag = 'smem constant byte address 0x4 - core index']
  #allocation1 [shape = 'u32[144,128]{1,0:T(1,128)}', space=vmem, size = 0x12000, scoped, tag = 'internal scratch']
  #allocation2 [shape = 'f32[4,32]{1,0:T(4,128)}', space=vmem, size = 0x800, scoped, tag = 'scratch operand']
  #allocation3 [shape = 'f32[4,16]{1,0:T(4,128)}', space=vmem, size = 0x800, scoped, tag = 'scratch operand']
  #allocation4 [shape = 's32[1]{0}', space=sflag, size = 0x4, scoped, tag = 'scoped memory for decoder_decode.1']
  #allocation5 [shape = 'u8[4096]{0}', space=smem, size = 0x1000, scoped, tag = 'prefetched SMEM operand 0']
  %s0 = inlined_call_operand.vmem [shape: s32[5,4], index: 0, kind: input, shape index: {}]
  %s1 = inlined_call_operand.vmem [shape: f32[4,32], index: 1, kind: input, shape index: {}]
  %s2 = inlined_call_operand.vmem [shape: f32[8,4,32], index: 2, kind: input, shape index: {}]
  %s3 = inlined_call_operand.vmem [shape: f32[4,8], index: 3, kind: input, shape index: {}]
  %s4 = inlined_call_operand.vmem [shape: f32[32,16], index: 4, kind: input, shape index: {}]
  %s5 = inlined_call_operand.vmem [shape: f32[64,32], index: 5, kind: input, shape index: {}]
  %s6 = inlined_call_operand.vmem [shape: f32[2,32], index: 6, kind: input, shape index: {}]
  %s7 = inlined_call_operand.vmem [shape: f32[48,96], index: 7, kind: input, shape index: {}]
  %s8 = inlined_call_operand.vmem [shape: f32[32,96], index: 8, kind: input, shape index: {}]
  %s9 = inlined_call_operand.vmem [shape: f32[2,96], index: 9, kind: input, shape index: {}]
  %s10 = inlined_call_operand.vmem [shape: f32[80,32], index: 10, kind: input, shape index: {}]
  %s11 = inlined_call_operand.vmem [shape: f32[1,32], index: 11, kind: input, shape index: {}]
  %s12 = inlined_call_operand.hbm [shape: f32[5,4,32], index: 12, kind: output, shape index: {0}]
  %s13 = inlined_call_operand.hbm [shape: f32[4,32], index: 13, kind: output, shape index: {1}]
  %s14 = inlined_call_operand.hbm [shape: f32[5,4,8], index: 14, kind: output, shape index: {2}]
  %15 = xla_tuple %s12, %s13, %s14
  %s16 = sld [smem:[#allocation0]]
  $region97: #{decoder_decode.1} parent=0
    _
  %s18 = ssub.s32 1, %s16
  %s19 = scalar_select 0, %s18, %s16
  %s20 = sshll.u32 %s0, 4
  %s21 = int_to_ptr.vmem [resolvable:$true] %s20
  %23 = dma.vmem_to_smem %s21, 128, [#allocation5], [#allocation4]
  %24 = dma.done [#allocation4], 128
  %25 = sfence
  $region1: #{decoder_decode.1} parent=0
    #allocation6 [shape = 'u8[4096]{0}', space=vmem, size = 0x1000, scoped, tag = 'output window, operand 0']
    #allocation7 [shape = 's32[2]{0}', space=sflag, size = 0x8, scoped, tag = 'scoped memory for decoder_decode.1']
    #allocation8 [shape = 'u8[2048]{0}', space=vmem, size = 0x800, scoped, tag = 'output window, operand 1, single buffered']
    #allocation9 [shape = 's32[1]{0}', space=sflag, size = 0x4, scoped, tag = 'scoped memory for decoder_decode.1']
    #allocation10 [shape = 'u8[4096]{0}', space=vmem, size = 0x1000, scoped, tag = 'output window, operand 2']
    %26 = vsyncpa [#allocation7], 0
    %s27 = scalar_lea.sflag [#allocation7], 1
    %28 = vsyncpa %s27, 0
    %29 = vsyncpa [#allocation9], 0
    loop: start=0, step=1, limit=7
    $region2: #{decoder_decode.1} parent=1 // loop_pre_header
      _
    $region3: #{decoder_decode.1} parent=1 // loop_header
      %s31 = sphi 0, %s35
      %p32 = scmp.ge.s32.totalorder %s31, 7
      %s39 = sphi 0, %s39
      %s41 = sphi 0, %s39
      %s42 = sphi 0, %s41
      %s56 = sphi 0, %s42
      %s60 = sphi 0, %s60
      %s62 = sphi 0, %s60
      %s63 = sphi 0, %s62
      %s77 = sphi 0, %s63
      %s81 = sphi 0, %s81
      %s83 = sphi 0, %s81
      %s84 = sphi 0, %s83
      %s98 = sphi 0, %s84
      %s102 = sphi 0, %s102
      %s104 = sphi 0, %s102
      %s105 = sphi 0, %s104
      %s119 = sphi 0, %s105
      %s123 = sphi 0, %s123
      %s125 = sphi 0, %s123
      %s126 = sphi 0, %s125
      %s140 = sphi 0, %s126
      %s144 = sphi 0, %s144
      %s146 = sphi 0, %s144
      %s147 = sphi 0, %s146
      %s161 = sphi 0, %s147
      %s165 = sphi 0, %s165
      %s167 = sphi 0, %s165
      %s168 = sphi 0, %s167
      %s182 = sphi 0, %s168
      %s186 = sphi 0, %s186
      %s188 = sphi 0, %s186
      %s189 = sphi 0, %s188
      %s203 = sphi 0, %s189
      %s207 = sphi 0, %s207
      %s209 = sphi 0, %s207
      %s210 = sphi 0, %s209
      %s224 = sphi 0, %s210
      %s228 = sphi 0, %s228
      %s230 = sphi 0, %s228
      %s231 = sphi 0, %s230
      %s245 = sphi 0, %s231
      %s249 = sphi 0, %s249
      %s251 = sphi 0, %s249
      %s252 = sphi 0, %s251
      %s266 = sphi 0, %s252
      %s272 = sphi 0, %s274
      %s275 = sphi 0, %s272
      %s276 = sphi 0, %s275
      %s292 = sphi 0, %s276
      %s296 = sphi 0, %s296
      %s298 = sphi 0, %s296
      %s299 = sphi 0, %s298
      %s313 = sphi 0, %s299
      %s319 = sphi 0, %s321
      %s322 = sphi 0, %s319
      %s323 = sphi 0, %s322
      %s339 = sphi 0, %s323
    $region4: #{decoder_decode.1} parent=1 // loop_header_branch
      %34 = sbr.rel (%p32) target = $region8
    $region5: #{decoder_decode.1} parent=1 // loop_body
      %s36 = ssub.s32 %s31, 1
      %s37 = ssub.s32 %s31, 2
      %s38 = sadd.s32 %s31, 1
      %s40 = sadd.s32 %s39, 1
      %p43 = scmp.eq.s32.totalorder %s31, 4
      %p44 = scmp.ne.s32.totalorder %s39, %s41
      %p45 = scmp.eq.s32.totalorder %s31, 0
      %p46 = por %p44, %p45
      %p47 = scmp.ne.s32.totalorder %s39, %s41
      %p48 = scmp.eq.s32.totalorder %s36, 4
      %p49 = por %p47, %p48
      %p50 = scmp.ne.s32.totalorder %s41, %s42
      %p51 = scmp.eq.s32.totalorder %s36, 0
      %p52 = por %p50, %p51
      %p53 = scmp.ne.s32.totalorder %s41, %s42
      %p54 = scmp.eq.s32.totalorder %s37, 4
      %p55 = por %p53, %p54
      %p57 = scmp.ne.s32.totalorder %s42, %s56
      %p58 = scmp.eq.s32.totalorder %s37, 0
      %p59 = por %p57, %p58
      %s61 = sadd.s32 %s60, 1
      %p64 = scmp.eq.s32.totalorder %s31, 4
      %p65 = scmp.ne.s32.totalorder %s60, %s62
      %p66 = scmp.eq.s32.totalorder %s31, 0
      %p67 = por %p65, %p66
      %p68 = scmp.ne.s32.totalorder %s60, %s62
      %p69 = scmp.eq.s32.totalorder %s36, 4
      %p70 = por %p68, %p69
      %p71 = scmp.ne.s32.totalorder %s62, %s63
      %p72 = scmp.eq.s32.totalorder %s36, 0
      %p73 = por %p71, %p72
      %p74 = scmp.ne.s32.totalorder %s62, %s63
      %p75 = scmp.eq.s32.totalorder %s37, 4
      %p76 = por %p74, %p75
      %p78 = scmp.ne.s32.totalorder %s63, %s77
      %p79 = scmp.eq.s32.totalorder %s37, 0
      %p80 = por %p78, %p79
      %s82 = sadd.s32 %s81, 1
      %p85 = scmp.eq.s32.totalorder %s31, 4
      %p86 = scmp.ne.s32.totalorder %s81, %s83
      %p87 = scmp.eq.s32.totalorder %s31, 0
      %p88 = por %p86, %p87
      %p89 = scmp.ne.s32.totalorder %s81, %s83
      %p90 = scmp.eq.s32.totalorder %s36, 4
      %p91 = por %p89, %p90
      %p92 = scmp.ne.s32.totalorder %s83, %s84
      %p93 = scmp.eq.s32.totalorder %s36, 0
      %p94 = por %p92, %p93
      %p95 = scmp.ne.s32.totalorder %s83, %s84
      %p96 = scmp.eq.s32.totalorder %s37, 4
      %p97 = por %p95, %p96
      %p99 = scmp.ne.s32.totalorder %s84, %s98
      %p100 = scmp.eq.s32.totalorder %s37, 0
      %p101 = por %p99, %p100
      %s103 = sadd.s32 %s102, 1
      %p106 = scmp.eq.s32.totalorder %s31, 4
      %p107 = scmp.ne.s32.totalorder %s102, %s104
      %p108 = scmp.eq.s32.totalorder %s31, 0
      %p109 = por %p107, %p108
      %p110 = scmp.ne.s32.totalorder %s102, %s104
      %p111 = scmp.eq.s32.totalorder %s36, 4
      %p112 = por %p110, %p111
      %p113 = scmp.ne.s32.totalorder %s104, %s105
      %p114 = scmp.eq.s32.totalorder %s36, 0
      %p115 = por %p113, %p114
      %p116 = scmp.ne.s32.totalorder %s104, %s105
      %p117 = scmp.eq.s32.totalorder %s37, 4
      %p118 = por %p116, %p117
      %p120 = scmp.ne.s32.totalorder %s105, %s119
      %p121 = scmp.eq.s32.totalorder %s37, 0
      %p122 = por %p120, %p121
      %s124 = sadd.s32 %s123, 1
      %p127 = scmp.eq.s32.totalorder %s31, 4
      %p128 = scmp.ne.s32.totalorder %s123, %s125
      %p129 = scmp.eq.s32.totalorder %s31, 0
      %p130 = por %p128, %p129
      %p131 = scmp.ne.s32.totalorder %s123, %s125
      %p132 = scmp.eq.s32.totalorder %s36, 4
      %p133 = por %p131, %p132
      %p134 = scmp.ne.s32.totalorder %s125, %s126
      %p135 = scmp.eq.s32.totalorder %s36, 0
      %p136 = por %p134, %p135
      %p137 = scmp.ne.s32.totalorder %s125, %s126
      %p138 = scmp.eq.s32.totalorder %s37, 4
      %p139 = por %p137, %p138
      %p141 = scmp.ne.s32.totalorder %s126, %s140
      %p142 = scmp.eq.s32.totalorder %s37, 0
      %p143 = por %p141, %p142
      %s145 = sadd.s32 %s144, 1
      %p148 = scmp.eq.s32.totalorder %s31, 4
      %p149 = scmp.ne.s32.totalorder %s144, %s146
      %p150 = scmp.eq.s32.totalorder %s31, 0
      %p151 = por %p149, %p150
      %p152 = scmp.ne.s32.totalorder %s144, %s146
      %p153 = scmp.eq.s32.totalorder %s36, 4
      %p154 = por %p152, %p153
      %p155 = scmp.ne.s32.totalorder %s146, %s147
      %p156 = scmp.eq.s32.totalorder %s36, 0
      %p157 = por %p155, %p156
      %p158 = scmp.ne.s32.totalorder %s146, %s147
      %p159 = scmp.eq.s32.totalorder %s37, 4
      %p160 = por %p158, %p159
      %p162 = scmp.ne.s32.totalorder %s147, %s161
      %p163 = scmp.eq.s32.totalorder %s37, 0
      %p164 = por %p162, %p163
      %s166 = sadd.s32 %s165, 1
      %p169 = scmp.eq.s32.totalorder %s31, 4
      %p170 = scmp.ne.s32.totalorder %s165, %s167
      %p171 = scmp.eq.s32.totalorder %s31, 0
      %p172 = por %p170, %p171
      %p173 = scmp.ne.s32.totalorder %s165, %s167
      %p174 = scmp.eq.s32.totalorder %s36, 4
      %p175 = por %p173, %p174
      %p176 = scmp.ne.s32.totalorder %s167, %s168
      %p177 = scmp.eq.s32.totalorder %s36, 0
      %p178 = por %p176, %p177
      %p179 = scmp.ne.s32.totalorder %s167, %s168
      %p180 = scmp.eq.s32.totalorder %s37, 4
      %p181 = por %p179, %p180
      %p183 = scmp.ne.s32.totalorder %s168, %s182
      %p184 = scmp.eq.s32.totalorder %s37, 0
      %p185 = por %p183, %p184
      %s187 = sadd.s32 %s186, 1
      %p190 = scmp.eq.s32.totalorder %s31, 4
      %p191 = scmp.ne.s32.totalorder %s186, %s188
      %p192 = scmp.eq.s32.totalorder %s31, 0
      %p193 = por %p191, %p192
      %p194 = scmp.ne.s32.totalorder %s186, %s188
      %p195 = scmp.eq.s32.totalorder %s36, 4
      %p196 = por %p194, %p195
      %p197 = scmp.ne.s32.totalorder %s188, %s189
      %p198 = scmp.eq.s32.totalorder %s36, 0
      %p199 = por %p197, %p198
      %p200 = scmp.ne.s32.totalorder %s188, %s189
      %p201 = scmp.eq.s32.totalorder %s37, 4
      %p202 = por %p200, %p201
      %p204 = scmp.ne.s32.totalorder %s189, %s203
      %p205 = scmp.eq.s32.totalorder %s37, 0
      %p206 = por %p204, %p205
      %s208 = sadd.s32 %s207, 1
      %p211 = scmp.eq.s32.totalorder %s31, 4
      %p212 = scmp.ne.s32.totalorder %s207, %s209
      %p213 = scmp.eq.s32.totalorder %s31, 0
      %p214 = por %p212, %p213
      %p215 = scmp.ne.s32.totalorder %s207, %s209
      %p216 = scmp.eq.s32.totalorder %s36, 4
      %p217 = por %p215, %p216
      %p218 = scmp.ne.s32.totalorder %s209, %s210
      %p219 = scmp.eq.s32.totalorder %s36, 0
      %p220 = por %p218, %p219
      %p221 = scmp.ne.s32.totalorder %s209, %s210
      %p222 = scmp.eq.s32.totalorder %s37, 4
      %p223 = por %p221, %p222
      %p225 = scmp.ne.s32.totalorder %s210, %s224
      %p226 = scmp.eq.s32.totalorder %s37, 0
      %p227 = por %p225, %p226
      %s229 = sadd.s32 %s228, 1
      %p232 = scmp.eq.s32.totalorder %s31, 4
      %p233 = scmp.ne.s32.totalorder %s228, %s230
      %p234 = scmp.eq.s32.totalorder %s31, 0
      %p235 = por %p233, %p234
      %p236 = scmp.ne.s32.totalorder %s228, %s230
      %p237 = scmp.eq.s32.totalorder %s36, 4
      %p238 = por %p236, %p237
      %p239 = scmp.ne.s32.totalorder %s230, %s231
      %p240 = scmp.eq.s32.totalorder %s36, 0
      %p241 = por %p239, %p240
      %p242 = scmp.ne.s32.totalorder %s230, %s231
      %p243 = scmp.eq.s32.totalorder %s37, 4
      %p244 = por %p242, %p243
      %p246 = scmp.ne.s32.totalorder %s231, %s245
      %p247 = scmp.eq.s32.totalorder %s37, 0
      %p248 = por %p246, %p247
      %s250 = sadd.s32 %s249, 1
      %p253 = scmp.eq.s32.totalorder %s31, 4
      %p254 = scmp.ne.s32.totalorder %s249, %s251
      %p255 = scmp.eq.s32.totalorder %s31, 0
      %p256 = por %p254, %p255
      %p257 = scmp.ne.s32.totalorder %s249, %s251
      %p258 = scmp.eq.s32.totalorder %s36, 4
      %p259 = por %p257, %p258
      %p260 = scmp.ne.s32.totalorder %s251, %s252
      %p261 = scmp.eq.s32.totalorder %s36, 0
      %p262 = por %p260, %p261
      %p263 = scmp.ne.s32.totalorder %s251, %s252
      %p264 = scmp.eq.s32.totalorder %s37, 4
      %p265 = por %p263, %p264
      %p267 = scmp.ne.s32.totalorder %s252, %s266
      %p268 = scmp.eq.s32.totalorder %s37, 0
      %p269 = por %p267, %p268
      %s270 = ssub.s32 %s31, %s38
      %p271 = scmp.eq.s32.totalorder %s270, 0
      %s273 = sadd.s32 %s272, 1
      %s274 = scalar_select %p271, %s272, %s273
      %p277 = pneg %p271
      %p278 = scmp.eq.s32.totalorder %s31, 4
      %p279 = por %p277, %p278
      %p280 = scmp.ne.s32.totalorder %s272, %s275
      %p281 = scmp.eq.s32.totalorder %s31, 0
      %p282 = por %p280, %p281
      %p283 = scmp.ne.s32.totalorder %s272, %s275
      %p284 = scmp.eq.s32.totalorder %s36, 4
      %p285 = por %p283, %p284
      %p286 = scmp.ne.s32.totalorder %s275, %s276
      %p287 = scmp.eq.s32.totalorder %s36, 0
      %p288 = por %p286, %p287
      %p289 = scmp.ne.s32.totalorder %s275, %s276
      %p290 = scmp.eq.s32.totalorder %s37, 4
      %p291 = por %p289, %p290
      %p293 = scmp.ne.s32.totalorder %s276, %s292
      %p294 = scmp.eq.s32.totalorder %s37, 0
      %p295 = por %p293, %p294
      %s297 = sadd.s32 %s296, 1
      %p300 = scmp.eq.s32.totalorder %s31, 4
      %p301 = scmp.ne.s32.totalorder %s296, %s298
      %p302 = scmp.eq.s32.totalorder %s31, 0
      %p303 = por %p301, %p302
      %p304 = scmp.ne.s32.totalorder %s296, %s298
      %p305 = scmp.eq.s32.totalorder %s36, 4
      %p306 = por %p304, %p305
      %p307 = scmp.ne.s32.totalorder %s298, %s299
      %p308 = scmp.eq.s32.totalorder %s36, 0
      %p309 = por %p307, %p308
      %p310 = scmp.ne.s32.totalorder %s298, %s299
      %p311 = scmp.eq.s32.totalorder %s37, 4
      %p312 = por %p310, %p311
      %p314 = scmp.ne.s32.totalorder %s299, %s313
      %p315 = scmp.eq.s32.totalorder %s37, 0
      %p316 = por %p314, %p315
      %s317 = ssub.s32 %s31, %s38
      %p318 = scmp.eq.s32.totalorder %s317, 0
      %s320 = sadd.s32 %s319, 1
      %s321 = scalar_select %p318, %s319, %s320
      %p324 = pneg %p318
      %p325 = scmp.eq.s32.totalorder %s31, 4
      %p326 = por %p324, %p325
      %p327 = scmp.ne.s32.totalorder %s319, %s322
      %p328 = scmp.eq.s32.totalorder %s31, 0
      %p329 = por %p327, %p328
      %p330 = scmp.ne.s32.totalorder %s319, %s322
      %p331 = scmp.eq.s32.totalorder %s36, 4
      %p332 = por %p330, %p331
      %p333 = scmp.ne.s32.totalorder %s322, %s323
      %p334 = scmp.eq.s32.totalorder %s36, 0
      %p335 = por %p333, %p334
      %p336 = scmp.ne.s32.totalorder %s322, %s323
      %p337 = scmp.eq.s32.totalorder %s37, 4
      %p338 = por %p336, %p337
      %p340 = scmp.ne.s32.totalorder %s323, %s339
      %p341 = scmp.eq.s32.totalorder %s37, 0
      %p342 = por %p340, %p341
      %p343 = scmp.le.s32.totalorder 1, %s31
      %p344 = scmp.lt.s32.totalorder %s31, 6
      %p345 = pnand %p343, %p344
      %p346 = pneg %p345
      // Predicated region
      $region9: #{decoder_decode.1} parent=5 // pred_check
        _
      $region10: #{decoder_decode.1} parent=5 // pred_check_branch
        %348 = sbr.rel (%p345) target = $region12
      $region11: #{decoder_decode.1} parent=5 // pred_region
        %s349 = ssub.s32 %s31, 1
        // Predicated region
        $region13: #{decoder_decode.1} parent=11 // pred_check
          %p350 = pneg %p52
        $region14: #{decoder_decode.1} parent=11 // pred_check_branch
          %352 = sbr.rel (%p350) target = $region16
        $region15: #{decoder_decode.1} parent=11 // pred_region
          _
        $region16: #{decoder_decode.1} parent=11 // pred_fallthru
          _
        // Predicated region
        $region17: #{decoder_decode.1} parent=11 // pred_check
          %p353 = pneg %p73
        $region18: #{decoder_decode.1} parent=11 // pred_check_branch
          %355 = sbr.rel (%p353) target = $region20
        $region19: #{decoder_decode.1} parent=11 // pred_region
          _
        $region20: #{decoder_decode.1} parent=11 // pred_fallthru
          _
        // Predicated region
        $region21: #{decoder_decode.1} parent=11 // pred_check
          %p356 = pneg %p94
        $region22: #{decoder_decode.1} parent=11 // pred_check_branch
          %358 = sbr.rel (%p356) target = $region24
        $region23: #{decoder_decode.1} parent=11 // pred_region
          _
        $region24: #{decoder_decode.1} parent=11 // pred_fallthru
          _
        // Predicated region
        $region25: #{decoder_decode.1} parent=11 // pred_check
          %p359 = pneg %p115
        $region26: #{decoder_decode.1} parent=11 // pred_check_branch
          %361 = sbr.rel (%p359) target = $region28
        $region27: #{decoder_decode.1} parent=11 // pred_region
          _
        $region28: #{decoder_decode.1} parent=11 // pred_fallthru
          _
        // Predicated region
        $region29: #{decoder_decode.1} parent=11 // pred_check
          %p362 = pneg %p136
        $region30: #{decoder_decode.1} parent=11 // pred_check_branch
          %364 = sbr.rel (%p362) target = $region32
        $region31: #{decoder_decode.1} parent=11 // pred_region
          _
        $region32: #{decoder_decode.1} parent=11 // pred_fallthru
          _
        // Predicated region
        $region33: #{decoder_decode.1} parent=11 // pred_check
          %p365 = pneg %p157
        $region34: #{decoder_decode.1} parent=11 // pred_check_branch
          %367 = sbr.rel (%p365) target = $region36
        $region35: #{decoder_decode.1} parent=11 // pred_region
          _
        $region36: #{decoder_decode.1} parent=11 // pred_fallthru
          _
        // Predicated region
        $region37: #{decoder_decode.1} parent=11 // pred_check
          %p368 = pneg %p178
        $region38: #{decoder_decode.1} parent=11 // pred_check_branch
          %370 = sbr.rel (%p368) target = $region40
        $region39: #{decoder_decode.1} parent=11 // pred_region
          _
        $region40: #{decoder_decode.1} parent=11 // pred_fallthru
          _
        // Predicated region
        $region41: #{decoder_decode.1} parent=11 // pred_check
          %p371 = pneg %p199
        $region42: #{decoder_decode.1} parent=11 // pred_check_branch
          %373 = sbr.rel (%p371) target = $region44
        $region43: #{decoder_decode.1} parent=11 // pred_region
          _
        $region44: #{decoder_decode.1} parent=11 // pred_fallthru
          _
        // Predicated region
        $region45: #{decoder_decode.1} parent=11 // pred_check
          %p374 = pneg %p220
        $region46: #{decoder_decode.1} parent=11 // pred_check_branch
          %376 = sbr.rel (%p374) target = $region48
        $region47: #{decoder_decode.1} parent=11 // pred_region
          _
        $region48: #{decoder_decode.1} parent=11 // pred_fallthru
          _
        // Predicated region
        $region49: #{decoder_decode.1} parent=11 // pred_check
          %p377 = pneg %p241
        $region50: #{decoder_decode.1} parent=11 // pred_check_branch
          %379 = sbr.rel (%p377) target = $region52
        $region51: #{decoder_decode.1} parent=11 // pred_region
          _
        $region52: #{decoder_decode.1} parent=11 // pred_fallthru
          _
        // Predicated region
        $region53: #{decoder_decode.1} parent=11 // pred_check
          %p380 = pneg %p262
        $region54: #{decoder_decode.1} parent=11 // pred_check_branch
          %382 = sbr.rel (%p380) target = $region56
        $region55: #{decoder_decode.1} parent=11 // pred_region
          _
        $region56: #{decoder_decode.1} parent=11 // pred_fallthru
          _
      $region12: #{decoder_decode.1} parent=5 // pred_fallthru
        _
      %p383 = scmp.lt.s32.totalorder %s31, 5
      // Predicated region
      $region57: #{decoder_decode.1} parent=5 // pred_check
        %p384 = pneg %p383
      $region58: #{decoder_decode.1} parent=5 // pred_check_branch
        %386 = sbr.rel (%p384) target = $region60
      $region59: #{decoder_decode.1} parent=5 // pred_region
        _
      $region60: #{decoder_decode.1} parent=5 // pred_fallthru
        _
      %p387 = scmp.le.s32.totalorder 1, %s31
      %p388 = scmp.lt.s32.totalorder %s31, 6
      %p389 = pnand %p387, %p388
      %p390 = pneg %p389
      // Predicated region
      $region61: #{decoder_decode.1} parent=5 // pred_check
        _
      $region62: #{decoder_decode.1} parent=5 // pred_check_branch
        %392 = sbr.rel (%p389) target = $region64
      $region63: #{decoder_decode.1} parent=5 // pred_region
        %s393 = ssub.s32 %s31, 1
        %p394 = pneg %p52
        %p395 = pneg %p49
        %p396 = pneg %p73
        %p397 = pneg %p70
        %p398 = pneg %p94
        %p399 = pneg %p91
        %p400 = pneg %p115
        %p401 = pneg %p112
        %p402 = pneg %p136
        %p403 = pneg %p133
        %p404 = pneg %p157
        %p405 = pneg %p154
        %p406 = pneg %p178
        %p407 = pneg %p175
        %p408 = pneg %p199
        %p409 = pneg %p196
        %p410 = pneg %p220
        %p411 = pneg %p217
        %p412 = pneg %p241
        %p413 = pneg %p238
        %p414 = pneg %p262
        %p415 = pneg %p259
        %p416 = pneg %p288
        %p417 = pneg %p285
        %s418 = sand.u32 %s36, 1
        %s419 = scalar_lea.sflag [#allocation7], %s418
        %s420 = sand.u32 %s275, 1
        %s421 = smul.addr %s420, 4
        %s422 = scalar_lea.vmem [#allocation6], %s421
        %p423 = pneg %p309
        %p424 = pneg %p306
        %p425 = pneg %p335
        %p426 = pneg %p332
        %s427 = sand.u32 %s36, 1
        %s428 = scalar_lea.sflag [#allocation7], %s427
        %s429 = sand.u32 %s322, 1
        %s430 = smul.addr %s429, 4
        %s431 = scalar_lea.vmem [#allocation10], %s430
        %p432 = scmp.eq.s32.totalorder %s36, 0
        // Predicated region
        $region65: #{decoder_decode.1} parent=63 // pred_check
          %p433 = pneg %p432
        $region66: #{decoder_decode.1} parent=63 // pred_check_branch
          %435 = sbr.rel (%p433) target = $region68
        $region67: #{decoder_decode.1} parent=63 // pred_region
          %v436 = vld [vmem:[%s1] sm:$0xf]
          %vm437 = vcmask 257024
          %438 = vst.msk [vmem:[#allocation2] sm:$0xf] %vm437, %v436
        $region68: #{decoder_decode.1} parent=63 // pred_fallthru
          _
        %v439 = vld [vmem:[#allocation2] sm:$0xf]
        %v440 = vld [vmem:[%s2] sm:$0xf]
        %v441 = vld [vmem:[%s2 + $0x4] sm:$0xf]
        %v442 = vld [vmem:[%s2 + $0x8] sm:$0xf]
        %v443 = vld [vmem:[%s2 + $0xc] sm:$0xf]
        %v444 = vld [vmem:[%s2 + $0x10] sm:$0xf]
        %v445 = vld [vmem:[%s2 + $0x14] sm:$0xf]
        %v446 = vld [vmem:[%s2 + $0x18] sm:$0xf]
        %v447 = vld [vmem:[%s2 + $0x1c] sm:$0xf]
        %s448 = smul.u32 %s36, 128
        %s449 = sld [smem:[#allocation5 + %s448]]
        %p450 = scmp.gt.s32.totalorder %s449, 0
        %s451 = scalar_select %p450, %s449, 0
        %p452 = scmp.lt.s32.totalorder %s451, 31
        %s453 = scalar_select %p452, %s451, 31
        %s454 = scalar_lea.vmem %s4, %s453
        %v455 = vld [vmem:[%s454] sm:$0x1]
        %vm456 = vcmask 122880
        %457 = vst.msk [vmem:[#allocation3] sm:$0x1] %vm456, %v455
        %s458 = sadd.s32 %s448, 1
        %s459 = sld [smem:[#allocation5 + %s458]]
        %p460 = scmp.gt.s32.totalorder %s459, 0
        %s461 = scalar_select %p460, %s459, 0
        %p462 = scmp.lt.s32.totalorder %s461, 31
        %s463 = scalar_select %p462, %s461, 31
        %s464 = scalar_lea.vmem %s4, %s463
        %v465 = vld [vmem:[%s464] sm:$0x1]
        %466 = vst.msk [vmem:[#allocation3 + $0x1] sm:$0x1] %vm456, %v465
        %s467 = sadd.s32 %s448, 2
        %s468 = sld [smem:[#allocation5 + %s467]]
        %p469 = scmp.gt.s32.totalorder %s468, 0
        %s470 = scalar_select %p469, %s468, 0
        %p471 = scmp.lt.s32.totalorder %s470, 31
        %s472 = scalar_select %p471, %s470, 31
        %s473 = scalar_lea.vmem %s4, %s472
        %v474 = vld [vmem:[%s473] sm:$0x1]
        %475 = vst.msk [vmem:[#allocation3 + $0x2] sm:$0x1] %vm456, %v474
        %s476 = sadd.s32 %s448, 3
        %s477 = sld [smem:[#allocation5 + %s476]]
        %p478 = scmp.gt.s32.totalorder %s477, 0
        %s479 = scalar_select %p478, %s477, 0
        %p480 = scmp.lt.s32.totalorder %s479, 31
        %s481 = scalar_select %p480, %s479, 31
        %s482 = scalar_lea.vmem %s4, %s481
        %v483 = vld [vmem:[%s482] sm:$0x1]
        %484 = vst.msk [vmem:[#allocation3 + $0x3] sm:$0x1] %vm456, %v483
        %v485 = vld [vmem:[#allocation3] sm:$0xf]
        %v486 = vld [vmem:[%s5] sm:$0xff]
        %v487 = vld [vmem:[%s5 + $0x8] sm:$0xff]
        %v488 = vld [vmem:[%s5 + $0x10] sm:$0xff]
        %v489 = vld [vmem:[%s5 + $0x18] sm:$0xff]
        %v490 = vld [vmem:[%s5 + $0x20] sm:$0xff]
        %v491 = vld [vmem:[%s5 + $0x28] sm:$0xff]
        %v492 = vld [vmem:[%s5 + $0x30] sm:$0xff]
        %v493 = vld [vmem:[%s5 + $0x38] sm:$0xff]
        %v494 = vld [vmem:[%s6] sm:$0x1]
        %v495 = vld [vmem:[%s6 + $0x1] sm:$0x1]
        %v496 = vlaneseq
        %v497 = vshrl.u32 %v496, 7
        %v498 = vsub.s32 0, %v497
        %v499 = vrot.slane %v494, %v498
        %vm500 = vcmask 261120
        %v502 = vsel %vm500, %v439, 0
        %504 = vmatprep.subr.mxu0 0.0
        %505 = vmatpush1.msra.mxu0 0.0
        %506 = vmatprep.subr.mxu0 0.0
        %507 = vmatpush1.msra.mxu0 0.0
        %508 = vmatprep.subr.mxu0 0.0
        %509 = vmatpush1.msra.mxu0 0.0
        %510 = vmatprep.subr.mxu0 0.0
        %511 = vmatpush1.msra.mxu0 0.0
        %512 = vmatprep.subr.mxu0 0.0
        %513 = vmatpush1.msra.mxu0 0.0
        %514 = vmatprep.subr.mxu0 0.0
        %515 = vmatpush1.msra.mxu0 0.0
        %516 = vmatprep.subr.mxu0 0.0
        %517 = vmatpush1.msra.mxu0 0.0
        %518 = vmatprep.subr.mxu0 0.0
        %519 = vmatpush1.msra.mxu0 0.0
        %520 = vmatprep.subr.mxu0 0.0
        %521 = vmatpush1.msra.mxu0 0.0
        %522 = vmatprep.subr.mxu0 0.0
        %523 = vmatpush1.msra.mxu0 0.0
        %524 = vmatprep.subr.mxu0 0.0
        %525 = vmatpush1.msra.mxu0 0.0
        %526 = vmatprep.subr.mxu0 0.0
        %527 = vmatpush1.msra.mxu0 0.0
        %528 = vmatprep.subr.mxu0 0.0
        %529 = vmatpush1.msra.mxu0 %v489
        %530 = vmatprep.subr.mxu0 0.0
        %531 = vmatpush1.msra.mxu0 %v488
        %532 = vmatprep.subr.mxu0 0.0
        %533 = vmatpush1.msra.mxu0 %v487
        %534 = vmatprep.subr.mxu0 0.0
        %535 = vmatpush1.msra.mxu0 %v486
        %536 = vmatprep.subr.mxu0 0.0
        %537 = vmatpush2.msra.mxu0 0.0
        %538 = vmatprep.subr.mxu0 0.0
        %539 = vmatpush2.msra.mxu0 0.0
        %540 = vmatprep.subr.mxu0 0.0
        %541 = vmatpush2.msra.mxu0 0.0
        %542 = vmatprep.subr.mxu0 0.0
        %543 = vmatpush2.msra.mxu0 0.0
        %544 = vmatprep.subr.mxu0 0.0
        %545 = vmatpush2.msra.mxu0 0.0
        %546 = vmatprep.subr.mxu0 0.0
        %547 = vmatpush2.msra.mxu0 0.0
        %548 = vmatprep.subr.mxu0 0.0
        %549 = vmatpush2.msra.mxu0 0.0
        %550 = vmatprep.subr.mxu0 0.0
        %551 = vmatpush2.msra.mxu0 0.0
        %552 = vmatprep.subr.mxu0 0.0
        %553 = vmatpush2.msra.mxu0 0.0
        %554 = vmatprep.subr.mxu0 0.0
        %555 = vmatpush2.msra.mxu0 0.0
        %556 = vmatprep.subr.mxu0 0.0
        %557 = vmatpush2.msra.mxu0 0.0
        %558 = vmatprep.subr.mxu0 0.0
        %559 = vmatpush2.msra.mxu0 0.0
        %560 = vmatprep.subr.mxu0 0.0
        %561 = vmatpush2.msra.mxu0 0.0
        %562 = vmatprep.subr.mxu0 0.0
        %563 = vmatpush2.msra.mxu0 0.0
        %564 = vmatprep.subr.mxu0 0.0
        %565 = vmatpush2.msra.mxu0 0.0
        %566 = vmatprep.subr.mxu0 0.0
        %567 = vmatpush2.msra.mxu0 0.0
        %568 = vmatprep.mubr.f32.mxu0 0.0
        %569 = vmatmul.mubr.f32.gmra.mxu0 %v502
        %v570 = vpop.f32.mrf.mxu0
        %v571 = vadd.f32 %v499, %v570
        %v572 = vpop.f32.mrf.mxu0
        %573 = vdwg.mxu0
        %v582 = vcombine.low %v440, %v441
        %v583 = vcombine.low %v442, %v443
        %v584 = vcombine.low %v444, %v445
        %v585 = vcombine.low %v446, %v447
        %v587 = vcombine.low %v571, %v571
        %v589 = vsel %vm500, %v582, 0
        %v591 = vsel %vm500, %v583, 0
        %v593 = vsel %vm500, %v584, 0
        %v595 = vsel %vm500, %v585, 0
        %597 = vmatprep.subr.mxu0 0.0
        %598 = vmatpush1.msra.mxu0 0.0
        %599 = vmatprep.subr.mxu0 0.0
        %600 = vmatpush1.msra.mxu0 0.0
        %601 = vmatprep.subr.mxu0 0.0
        %602 = vmatpush1.msra.mxu0 0.0
        %603 = vmatprep.subr.mxu0 0.0
        %604 = vmatpush1.msra.mxu0 0.0
        %605 = vmatprep.subr.mxu0 0.0
        %606 = vmatpush1.msra.mxu0 0.0
        %607 = vmatprep.subr.mxu0 0.0
        %608 = vmatpush1.msra.mxu0 0.0
        %609 = vmatprep.subr.mxu0 0.0
        %610 = vmatpush1.msra.mxu0 0.0
        %611 = vmatprep.subr.mxu0 0.0
        %612 = vmatpush1.msra.mxu0 0.0
        %613 = vmatprep.subr.mxu0 0.0
        %614 = vmatpush1.msra.mxu0 0.0
        %615 = vmatprep.subr.mxu0 0.0
        %616 = vmatpush1.msra.mxu0 0.0
        %617 = vmatprep.subr.mxu0 0.0
        %618 = vmatpush1.msra.mxu0 0.0
        %619 = vmatprep.subr.mxu0 0.0
        %620 = vmatpush1.msra.mxu0 0.0
        %621 = vmatprep.subr.mxu0 0.0
        %622 = vmatpush1.msra.mxu0 %v493
        %623 = vmatprep.subr.mxu0 0.0
        %624 = vmatpush1.msra.mxu0 %v492
        %625 = vmatprep.subr.mxu0 0.0
        %626 = vmatpush1.msra.mxu0 %v491
        %627 = vmatprep.subr.mxu0 0.0
        %628 = vmatpush1.msra.mxu0 %v490
        %629 = vmatprep.subr.mxu0 0.0
        %630 = vmatpush2.msra.mxu0 0.0
        %631 = vmatprep.subr.mxu0 0.0
        %632 = vmatpush2.msra.mxu0 0.0
        %633 = vmatprep.subr.mxu0 0.0
        %634 = vmatpush2.msra.mxu0 0.0
        %635 = vmatprep.subr.mxu0 0.0
        %636 = vmatpush2.msra.mxu0 0.0
        %637 = vmatprep.subr.mxu0 0.0
        %638 = vmatpush2.msra.mxu0 0.0
        %639 = vmatprep.subr.mxu0 0.0
        %640 = vmatpush2.msra.mxu0 0.0
        %641 = vmatprep.subr.mxu0 0.0
        %642 = vmatpush2.msra.mxu0 0.0
        %643 = vmatprep.subr.mxu0 0.0
        %644 = vmatpush2.msra.mxu0 0.0
        %645 = vmatprep.subr.mxu0 0.0
        %646 = vmatpush2.msra.mxu0 0.0
        %647 = vmatprep.subr.mxu0 0.0
        %648 = vmatpush2.msra.mxu0 0.0
        %649 = vmatprep.subr.mxu0 0.0
        %650 = vmatpush2.msra.mxu0 0.0
        %651 = vmatprep.subr.mxu0 0.0
        %652 = vmatpush2.msra.mxu0 0.0
        %653 = vmatprep.subr.mxu0 0.0
        %654 = vmatpush2.msra.mxu0 0.0
        %655 = vmatprep.subr.mxu0 0.0
        %656 = vmatpush2.msra.mxu0 0.0
        %657 = vmatprep.subr.mxu0 0.0
        %658 = vmatpush2.msra.mxu0 0.0
        %659 = vmatprep.subr.mxu0 0.0
        %660 = vmatpush2.msra.mxu0 0.0
        %661 = vmatprep.mubr.f32.mxu0 0.0
        %662 = vmatmul.mubr.f32.gmra.mxu0 %v589
        %v663 = vpop.f32.mrf.mxu0
        %v664 = vadd.f32 %v587, %v663
        %v665 = vpop.f32.mrf.mxu0
        %666 = vmatprep.mubr.f32.mxu0 0.0
        %667 = vmatmul.mubr.f32.gmra.mxu0 %v591
        %v668 = vpop.f32.mrf.mxu0
        %v669 = vadd.f32 %v587, %v668
        %v670 = vpop.f32.mrf.mxu0
        %671 = vmatprep.mubr.f32.mxu0 0.0
        %672 = vmatmul.mubr.f32.gmra.mxu0 %v593
        %v673 = vpop.f32.mrf.mxu0
        %v674 = vadd.f32 %v587, %v673
        %v675 = vpop.f32.mrf.mxu0
        %676 = vmatprep.mubr.f32.mxu0 0.0
        %677 = vmatmul.mubr.f32.gmra.mxu0 %v595
        %v678 = vpop.f32.mrf.mxu0
        %v679 = vadd.f32 %v587, %v678
        %v680 = vpop.f32.mrf.mxu0
        %681 = vdwg.mxu0
        %v686 = vcombine.high %v664, %v664
        %v687 = vcombine.high %v669, %v669
        %v688 = vcombine.high %v674, %v674
        %v689 = vcombine.high %v679, %v679
        %v694 = vtanh.pop %v664
        %v695 = vtanh.pop %v686
        %v696 = vtanh.pop %v669
        %v697 = vtanh.pop %v687
        %v698 = vtanh.pop %v674
        %v699 = vtanh.pop %v688
        %v700 = vtanh.pop %v679
        %v701 = vtanh.pop %v689
        %v702 = vlaneseq
        %v703 = vshrl.u32 %v702, 7
        %v704 = vsub.s32 0, %v703
        %v705 = vrot.slane %v495, %v704
        %v706 = vmul.f32 %v694, %v705
        %v707 = vmul.f32 %v695, %v705
        %v708 = vmul.f32 %v696, %v705
        %v709 = vmul.f32 %v697, %v705
        %v710 = vmul.f32 %v698, %v705
        %v711 = vmul.f32 %v699, %v705
        %v712 = vmul.f32 %v700, %v705
        %v713 = vmul.f32 %v701, %v705
        %vm714 = vcmask 257024
        %v715 = vsel %vm714, %v706, 0.0
        %716 = vadd.xlane.f32.xlu0 %v715
        %v717 = vpop.xlane.xlu0 %716
        %v718 = vsel %vm714, %v707, 0.0
        %719 = vadd.xlane.f32.xlu0 %v718
        %v720 = vpop.xlane.xlu0 %719
        %v721 = vsel %vm714, %v708, 0.0
        %722 = vadd.xlane.f32.xlu0 %v721
        %v723 = vpop.xlane.xlu0 %722
        %v724 = vsel %vm714, %v709, 0.0
        %725 = vadd.xlane.f32.xlu0 %v724
        %v726 = vpop.xlane.xlu0 %725
        %v727 = vsel %vm714, %v710, 0.0
        %728 = vadd.xlane.f32.xlu0 %v727
        %v729 = vpop.xlane.xlu0 %728
        %v730 = vsel %vm714, %v711, 0.0
        %731 = vadd.xlane.f32.xlu0 %v730
        %v732 = vpop.xlane.xlu0 %731
        %v733 = vsel %vm714, %v712, 0.0
        %734 = vadd.xlane.f32.xlu0 %v733
        %v735 = vpop.xlane.xlu0 %734
        %v736 = vsel %vm714, %v713, 0.0
        %737 = vadd.xlane.f32.xlu0 %v736
        %v738 = vpop.xlane.xlu0 %737
        %v739 = vld [vmem:[%s3] sm:$0xf]
        %740 = vxpose.xlu0.b32.start [1/16] %v739, 128
        %741 = vxpose.xlu0.b32.cont [2/16] 0.0, 128
        %742 = vxpose.xlu0.b32.cont [3/16] 0.0, 128
        %743 = vxpose.xlu0.b32.cont [4/16] 0.0, 128
        %744 = vxpose.xlu0.b32.cont [5/16] 0.0, 128
        %745 = vxpose.xlu0.b32.cont [6/16] 0.0, 128
        %746 = vxpose.xlu0.b32.cont [7/16] 0.0, 128
        %747 = vxpose.xlu0.b32.cont [8/16] 0.0, 128
        %748 = vxpose.xlu0.b32.cont [9/16] 0.0, 128
        %749 = vxpose.xlu0.b32.cont [10/16] 0.0, 128
        %750 = vxpose.xlu0.b32.cont [11/16] 0.0, 128
        %751 = vxpose.xlu0.b32.cont [12/16] 0.0, 128
        %752 = vxpose.xlu0.b32.cont [13/16] 0.0, 128
        %753 = vxpose.xlu0.b32.cont [14/16] 0.0, 128
        %754 = vxpose.xlu0.b32.cont [15/16] 0.0, 128
        %755 = vxpose.xlu0.b32.end [16/16] 0.0, 128
        %v756 = vpop.trf.xlu0
        %v757 = vpop.trf.xlu0
        %v758 = vpop.trf.xlu0
        %v759 = vpop.trf.xlu0
        %v760 = vpop.trf.xlu0
        %v761 = vpop.trf.xlu0
        %v762 = vpop.trf.xlu0
        %v763 = vpop.trf.xlu0
        %v764 = vpop.trf.xlu0
        %v765 = vpop.trf.xlu0
        %v766 = vpop.trf.xlu0
        %v767 = vpop.trf.xlu0
        %v768 = vpop.trf.xlu0
        %v769 = vpop.trf.xlu0
        %v770 = vpop.trf.xlu0
        %v771 = vpop.trf.xlu0
        %vm772 = vcmp.eq.f32.partialorder %v756, 0.0
        %v781 = vlaneseq
        %v782 = vand.u32 %v781, 127
        %v783 = vlaneseq
        %v784 = vshrl.u32 %v783, 7
        %v785 = vsub.s32 %v782, %v784
        %v786 = vrot.slane %v717, %v785
        %v787 = vlaneseq
        %v788 = vshrl.u32 %v787, 7
        %v789 = vsub.s32 %v782, %v788
        %v790 = vrot.slane %v720, %v789
        %v791 = vlaneseq
        %v792 = vshrl.u32 %v791, 7
        %v793 = vsub.s32 %v782, %v792
        %v794 = vrot.slane %v723, %v793
        %v795 = vlaneseq
        %v796 = vshrl.u32 %v795, 7
        %v797 = vsub.s32 %v782, %v796
        %v798 = vrot.slane %v726, %v797
        %v799 = vlaneseq
        %v800 = vshrl.u32 %v799, 7
        %v801 = vsub.s32 %v782, %v800
        %v802 = vrot.slane %v729, %v801
        %v803 = vlaneseq
        %v804 = vshrl.u32 %v803, 7
        %v805 = vsub.s32 %v782, %v804
        %v806 = vrot.slane %v732, %v805
        %v807 = vlaneseq
        %v808 = vshrl.u32 %v807, 7
        %v809 = vsub.s32 %v782, %v808
        %v810 = vrot.slane %v735, %v809
        %v811 = vlaneseq
        %v812 = vshrl.u32 %v811, 7
        %v813 = vsub.s32 %v782, %v812
        %v814 = vrot.slane %v738, %v813
        %vm815 = vcmask 1041409
        %v816 = vsel %vm815, %v790, %v786
        %vm817 = vcmask 1042434
        %v818 = vsel %vm817, %v794, %v816
        %vm819 = vcmask 1043459
        %v820 = vsel %vm819, %v798, %v818
        %vm821 = vcmask 1044484
        %v822 = vsel %vm821, %v802, %v820
        %vm823 = vcmask 1045509
        %v824 = vsel %vm823, %v806, %v822
        %vm825 = vcmask 1046534
        %v826 = vsel %vm825, %v810, %v824
        %vm827 = vcmask 1047559
        %v828 = vsel %vm827, %v814, %v826
        %v830 = vsel %vm772, -1e+10, %v828
        %vm831 = vcmask 31744
        %v832 = vsel %vm831, %v830, -inf
        %v833 = vrot.slane %v832, 4
        %v834 = vmax.f32 %v832, %v833
        %v835 = vrot.slane %v834, 2
        %v836 = vmax.f32 %v834, %v835
        %v837 = vrot.slane %v836, 1
        %v838 = vmax.f32 %v836, %v837
        %v839 = vsub.f32 %v830, %v838
        %v840 = vmul.f32 %v839, 1.442695
        %v841 = vpow.pop %v840
        %v842 = vsel %vm831, %v841, 0.0
        %v843 = vrot.slane %v842, 4
        %v844 = vadd.f32 %v842, %v843
        %v845 = vrot.slane %v844, 2
        %v846 = vadd.f32 %v844, %v845
        %v847 = vrot.slane %v846, 1
        %v848 = vadd.f32 %v846, %v847
        %v849 = vrcp.pop %v848
        %v850 = vmul.f32 %v841, %v849
        %851 = vxpose.xlu0.b32.start [1/16] %v850, 128
        %852 = vxpose.xlu0.b32.cont [2/16] 0.0, 128
        %853 = vxpose.xlu0.b32.cont [3/16] 0.0, 128
        %854 = vxpose.xlu0.b32.cont [4/16] 0.0, 128
        %855 = vxpose.xlu0.b32.cont [5/16] 0.0, 128
        %856 = vxpose.xlu0.b32.cont [6/16] 0.0, 128
        %857 = vxpose.xlu0.b32.cont [7/16] 0.0, 128
        %858 = vxpose.xlu0.b32.cont [8/16] 0.0, 128
        %859 = vxpose.xlu0.b32.cont [9/16] 0.0, 128
        %860 = vxpose.xlu0.b32.cont [10/16] 0.0, 128
        %861 = vxpose.xlu0.b32.cont [11/16] 0.0, 128
        %862 = vxpose.xlu0.b32.cont [12/16] 0.0, 128
        %863 = vxpose.xlu0.b32.cont [13/16] 0.0, 128
        %864 = vxpose.xlu0.b32.cont [14/16] 0.0, 128
        %865 = vxpose.xlu0.b32.cont [15/16] 0.0, 128
        %866 = vxpose.xlu0.b32.end [16/16] 0.0, 128
        %v867 = vpop.trf.xlu0
        %v868 = vpop.trf.xlu0
        %v869 = vpop.trf.xlu0
        %v870 = vpop.trf.xlu0
        %v871 = vpop.trf.xlu0
        %v872 = vpop.trf.xlu0
        %v873 = vpop.trf.xlu0
        %v874 = vpop.trf.xlu0
        %v875 = vpop.trf.xlu0
        %v876 = vpop.trf.xlu0
        %v877 = vpop.trf.xlu0
        %v878 = vpop.trf.xlu0
        %v879 = vpop.trf.xlu0
        %v880 = vpop.trf.xlu0
        %v881 = vpop.trf.xlu0
        %v882 = vpop.trf.xlu0
        %vm883 = vcmask 60416
        %884 = vst.msk [vmem:[%s431] sm:$0xf] %vm883, %v867
        %v885 = vlaneseq
        %v886 = vshrl.u32 %v885, 7
        %v887 = vsub.s32 0, %v886
        %v888 = vrot.slane %v850, %v887
        %890 = vbcast.lane.b32.xlu0 %v888, 256
        %v891 = vpop.permute.xlu0 %890
        %v892 = vlaneseq
        %v893 = vshrl.u32 %v892, 7
        %v894 = vsub.s32 1, %v893
        %v895 = vrot.slane %v850, %v894
        %897 = vbcast.lane.b32.xlu0 %v895, 256
        %v898 = vpop.permute.xlu0 %897
        %v899 = vlaneseq
        %v900 = vshrl.u32 %v899, 7
        %v901 = vsub.s32 2, %v900
        %v902 = vrot.slane %v850, %v901
        %904 = vbcast.lane.b32.xlu0 %v902, 256
        %v905 = vpop.permute.xlu0 %904
        %v906 = vlaneseq
        %v907 = vshrl.u32 %v906, 7
        %v908 = vsub.s32 3, %v907
        %v909 = vrot.slane %v850, %v908
        %911 = vbcast.lane.b32.xlu0 %v909, 256
        %v912 = vpop.permute.xlu0 %911
        %v913 = vlaneseq
        %v914 = vshrl.u32 %v913, 7
        %v915 = vsub.s32 4, %v914
        %v916 = vrot.slane %v850, %v915
        %918 = vbcast.lane.b32.xlu0 %v916, 256
        %v919 = vpop.permute.xlu0 %918
        %v920 = vlaneseq
        %v921 = vshrl.u32 %v920, 7
        %v922 = vsub.s32 5, %v921
        %v923 = vrot.slane %v850, %v922
        %925 = vbcast.lane.b32.xlu0 %v923, 256
        %v926 = vpop.permute.xlu0 %925
        %v927 = vlaneseq
        %v928 = vshrl.u32 %v927, 7
        %v929 = vsub.s32 6, %v928
        %v930 = vrot.slane %v850, %v929
        %932 = vbcast.lane.b32.xlu0 %v930, 256
        %v933 = vpop.permute.xlu0 %932
        %v934 = vlaneseq
        %v935 = vshrl.u32 %v934, 7
        %v936 = vsub.s32 7, %v935
        %v937 = vrot.slane %v850, %v936
        %939 = vbcast.lane.b32.xlu0 %v937, 256
        %v940 = vpop.permute.xlu0 %939
        %v941 = vmul.f32 %v891, %v440
        %v942 = vmul.f32 %v898, %v441
        %v943 = vmul.f32 %v905, %v442
        %v944 = vmul.f32 %v912, %v443
        %v945 = vmul.f32 %v919, %v444
        %v946 = vmul.f32 %v926, %v445
        %v947 = vmul.f32 %v933, %v446
        %v948 = vmul.f32 %v940, %v447
        %v949 = vsel %vm714, %v941, 0.0
        %v950 = vsel %vm714, %v942, 0.0
        %v951 = vadd.f32 %v949, %v950
        %v952 = vsel %vm714, %v943, 0.0
        %v953 = vadd.f32 %v951, %v952
        %v954 = vsel %vm714, %v944, 0.0
        %v955 = vadd.f32 %v953, %v954
        %v956 = vsel %vm714, %v945, 0.0
        %v957 = vadd.f32 %v955, %v956
        %v958 = vsel %vm714, %v946, 0.0
        %v959 = vadd.f32 %v957, %v958
        %v960 = vsel %vm714, %v947, 0.0
        %v961 = vadd.f32 %v959, %v960
        %v962 = vsel %vm714, %v948, 0.0
        %v963 = vadd.f32 %v961, %v962
        %v964 = vld [vmem:[%s7] sm:$0xff]
        %v965 = vld [vmem:[%s7 + $0x8] sm:$0xff]
        %v966 = vld [vmem:[%s7 + $0x10] sm:$0xff]
        %v967 = vld [vmem:[%s7 + $0x18] sm:$0xff]
        %v968 = vld [vmem:[%s7 + $0x20] sm:$0xff]
        %v969 = vld [vmem:[%s7 + $0x28] sm:$0xff]
        %v970 = vld [vmem:[%s9] sm:$0x1]
        %v971 = vld [vmem:[%s9 + $0x1] sm:$0x1]
        %v973 = vsel %vm500, %v963, 0
        %975 = vmatprep.subr.mxu0 0.0
        %976 = vmatpush1.msra.mxu0 0.0
        %977 = vmatprep.subr.mxu0 0.0
        %978 = vmatpush1.msra.mxu0 0.0
        %979 = vmatprep.subr.mxu0 0.0
        %980 = vmatpush1.msra.mxu0 0.0
        %981 = vmatprep.subr.mxu0 0.0
        %982 = vmatpush1.msra.mxu0 0.0
        %983 = vmatprep.subr.mxu0 0.0
        %984 = vmatpush1.msra.mxu0 0.0
        %985 = vmatprep.subr.mxu0 0.0
        %986 = vmatpush1.msra.mxu0 0.0
        %987 = vmatprep.subr.mxu0 0.0
        %988 = vmatpush1.msra.mxu0 0.0
        %989 = vmatprep.subr.mxu0 0.0
        %990 = vmatpush1.msra.mxu0 0.0
        %991 = vmatprep.subr.mxu0 0.0
        %992 = vmatpush1.msra.mxu0 0.0
        %993 = vmatprep.subr.mxu0 0.0
        %994 = vmatpush1.msra.mxu0 0.0
        %995 = vmatprep.subr.mxu0 0.0
        %996 = vmatpush1.msra.mxu0 0.0
        %997 = vmatprep.subr.mxu0 0.0
        %998 = vmatpush1.msra.mxu0 0.0
        %999 = vmatprep.subr.mxu0 0.0
        %1000 = vmatpush1.msra.mxu0 %v969
        %1001 = vmatprep.subr.mxu0 0.0
        %1002 = vmatpush1.msra.mxu0 %v968
        %1003 = vmatprep.subr.mxu0 0.0
        %1004 = vmatpush1.msra.mxu0 %v967
        %1005 = vmatprep.subr.mxu0 0.0
        %1006 = vmatpush1.msra.mxu0 %v966
        %1007 = vmatprep.subr.mxu0 0.0
        %1008 = vmatpush2.msra.mxu0 0.0
        %1009 = vmatprep.subr.mxu0 0.0
        %1010 = vmatpush2.msra.mxu0 0.0
        %1011 = vmatprep.subr.mxu0 0.0
        %1012 = vmatpush2.msra.mxu0 0.0
        %1013 = vmatprep.subr.mxu0 0.0
        %1014 = vmatpush2.msra.mxu0 0.0
        %1015 = vmatprep.subr.mxu0 0.0
        %1016 = vmatpush2.msra.mxu0 0.0
        %1017 = vmatprep.subr.mxu0 0.0
        %1018 = vmatpush2.msra.mxu0 0.0
        %1019 = vmatprep.subr.mxu0 0.0
        %1020 = vmatpush2.msra.mxu0 0.0
        %1021 = vmatprep.subr.mxu0 0.0
        %1022 = vmatpush2.msra.mxu0 0.0
        %1023 = vmatprep.subr.mxu0 0.0
        %1024 = vmatpush2.msra.mxu0 0.0
        %1025 = vmatprep.subr.mxu0 0.0
        %1026 = vmatpush2.msra.mxu0 0.0
        %1027 = vmatprep.subr.mxu0 0.0
        %1028 = vmatpush2.msra.mxu0 0.0
        %1029 = vmatprep.subr.mxu0 0.0
        %1030 = vmatpush2.msra.mxu0 0.0
        %1031 = vmatprep.subr.mxu0 0.0
        %1032 = vmatpush2.msra.mxu0 0.0
        %1033 = vmatprep.subr.mxu0 0.0
        %1034 = vmatpush2.msra.mxu0 0.0
        %1035 = vmatprep.subr.mxu0 0.0
        %1036 = vmatpush2.msra.mxu0 0.0
        %1037 = vmatprep.subr.mxu0 0.0
        %1038 = vmatpush2.msra.mxu0 0.0
        %1039 = vmatprep.mubr.f32.mxu0 0.0
        %1040 = vmatmul.mubr.f32.gmra.mxu0 %v973
        %v1041 = vpop.f32.mrf.mxu0
        %v1042 = vadd.f32 0.0, %v1041
        %v1043 = vpop.f32.mrf.mxu0
        %1044 = vdwg.mxu0
        %vm1045 = vcmask 130048
        %v1047 = vsel %vm1045, %v485, 0
        %1049 = vmatprep.subr.mxu0 0.0
        %1050 = vmatpush1.msra.mxu0 0.0
        %1051 = vmatprep.subr.mxu0 0.0
        %1052 = vmatpush1.msra.mxu0 0.0
        %1053 = vmatprep.subr.mxu0 0.0
        %1054 = vmatpush1.msra.mxu0 0.0
        %1055 = vmatprep.subr.mxu0 0.0
        %1056 = vmatpush1.msra.mxu0 0.0
        %1057 = vmatprep.subr.mxu0 0.0
        %1058 = vmatpush1.msra.mxu0 0.0
        %1059 = vmatprep.subr.mxu0 0.0
        %1060 = vmatpush1.msra.mxu0 0.0
        %1061 = vmatprep.subr.mxu0 0.0
        %1062 = vmatpush1.msra.mxu0 0.0
        %1063 = vmatprep.subr.mxu0 0.0
        %1064 = vmatpush1.msra.mxu0 0.0
        %1065 = vmatprep.subr.mxu0 0.0
        %1066 = vmatpush1.msra.mxu0 0.0
        %1067 = vmatprep.subr.mxu0 0.0
        %1068 = vmatpush1.msra.mxu0 0.0
        %1069 = vmatprep.subr.mxu0 0.0
        %1070 = vmatpush1.msra.mxu0 0.0
        %1071 = vmatprep.subr.mxu0 0.0
        %1072 = vmatpush1.msra.mxu0 0.0
        %1073 = vmatprep.subr.mxu0 0.0
        %1074 = vmatpush1.msra.mxu0 0.0
        %1075 = vmatprep.subr.mxu0 0.0
        %1076 = vmatpush1.msra.mxu0 0.0
        %1077 = vmatprep.subr.mxu0 0.0
        %1078 = vmatpush1.msra.mxu0 %v965
        %1079 = vmatprep.subr.mxu0 0.0
        %1080 = vmatpush1.msra.mxu0 %v964
        %1081 = vmatprep.subr.mxu0 0.0
        %1082 = vmatpush2.msra.mxu0 0.0
        %1083 = vmatprep.subr.mxu0 0.0
        %1084 = vmatpush2.msra.mxu0 0.0
        %1085 = vmatprep.subr.mxu0 0.0
        %1086 = vmatpush2.msra.mxu0 0.0
        %1087 = vmatprep.subr.mxu0 0.0
        %1088 = vmatpush2.msra.mxu0 0.0
        %1089 = vmatprep.subr.mxu0 0.0
        %1090 = vmatpush2.msra.mxu0 0.0
        %1091 = vmatprep.subr.mxu0 0.0
        %1092 = vmatpush2.msra.mxu0 0.0
        %1093 = vmatprep.subr.mxu0 0.0
        %1094 = vmatpush2.msra.mxu0 0.0
        %1095 = vmatprep.subr.mxu0 0.0
        %1096 = vmatpush2.msra.mxu0 0.0
        %1097 = vmatprep.subr.mxu0 0.0
        %1098 = vmatpush2.msra.mxu0 0.0
        %1099 = vmatprep.subr.mxu0 0.0
        %1100 = vmatpush2.msra.mxu0 0.0
        %1101 = vmatprep.subr.mxu0 0.0
        %1102 = vmatpush2.msra.mxu0 0.0
        %1103 = vmatprep.subr.mxu0 0.0
        %1104 = vmatpush2.msra.mxu0 0.0
        %1105 = vmatprep.subr.mxu0 0.0
        %1106 = vmatpush2.msra.mxu0 0.0
        %1107 = vmatprep.subr.mxu0 0.0
        %1108 = vmatpush2.msra.mxu0 0.0
        %1109 = vmatprep.subr.mxu0 0.0
        %1110 = vmatpush2.msra.mxu0 0.0
        %1111 = vmatprep.subr.mxu0 0.0
        %1112 = vmatpush2.msra.mxu0 0.0
        %1113 = vmatprep.mubr.f32.mxu0 0.0
        %1114 = vmatmul.mubr.f32.gmra.mxu0 %v1047
        %v1115 = vpop.f32.mrf.mxu0
        %v1116 = vadd.f32 %v1042, %v1115
        %v1117 = vpop.f32.mrf.mxu0
        %1118 = vdwg.mxu0
        %v1119 = vlaneseq
        %v1120 = vshrl.u32 %v1119, 7
        %v1121 = vsub.s32 0, %v1120
        %v1122 = vrot.slane %v970, %v1121
        %v1123 = vadd.f32 %v1116, %v1122
        %v1124 = vld [vmem:[%s8] sm:$0xff]
        %v1125 = vld [vmem:[%s8 + $0x8] sm:$0xff]
        %v1126 = vld [vmem:[%s8 + $0x10] sm:$0xff]
        %v1127 = vld [vmem:[%s8 + $0x18] sm:$0xff]
        %v1128 = vlaneseq
        %v1129 = vshrl.u32 %v1128, 7
        %v1130 = vsub.s32 0, %v1129
        %v1131 = vrot.slane %v971, %v1130
        %1132 = vmatprep.subr.mxu0 0.0
        %1133 = vmatpush1.msra.mxu0 0.0
        %1134 = vmatprep.subr.mxu0 0.0
        %1135 = vmatpush1.msra.mxu0 0.0
        %1136 = vmatprep.subr.mxu0 0.0
        %1137 = vmatpush1.msra.mxu0 0.0
        %1138 = vmatprep.subr.mxu0 0.0
        %1139 = vmatpush1.msra.mxu0 0.0
        %1140 = vmatprep.subr.mxu0 0.0
        %1141 = vmatpush1.msra.mxu0 0.0
        %1142 = vmatprep.subr.mxu0 0.0
        %1143 = vmatpush1.msra.mxu0 0.0
        %1144 = vmatprep.subr.mxu0 0.0
        %1145 = vmatpush1.msra.mxu0 0.0
        %1146 = vmatprep.subr.mxu0 0.0
        %1147 = vmatpush1.msra.mxu0 0.0
        %1148 = vmatprep.subr.mxu0 0.0
        %1149 = vmatpush1.msra.mxu0 0.0
        %1150 = vmatprep.subr.mxu0 0.0
        %1151 = vmatpush1.msra.mxu0 0.0
        %1152 = vmatprep.subr.mxu0 0.0
        %1153 = vmatpush1.msra.mxu0 0.0
        %1154 = vmatprep.subr.mxu0 0.0
        %1155 = vmatpush1.msra.mxu0 0.0
        %1156 = vmatprep.subr.mxu0 0.0
        %1157 = vmatpush1.msra.mxu0 %v1127
        %1158 = vmatprep.subr.mxu0 0.0
        %1159 = vmatpush1.msra.mxu0 %v1126
        %1160 = vmatprep.subr.mxu0 0.0
        %1161 = vmatpush1.msra.mxu0 %v1125
        %1162 = vmatprep.subr.mxu0 0.0
        %1163 = vmatpush1.msra.mxu0 %v1124
        %1164 = vmatprep.subr.mxu0 0.0
        %1165 = vmatpush2.msra.mxu0 0.0
        %1166 = vmatprep.subr.mxu0 0.0
        %1167 = vmatpush2.msra.mxu0 0.0
        %1168 = vmatprep.subr.mxu0 0.0
        %1169 = vmatpush2.msra.mxu0 0.0
        %1170 = vmatprep.subr.mxu0 0.0
        %1171 = vmatpush2.msra.mxu0 0.0
        %1172 = vmatprep.subr.mxu0 0.0
        %1173 = vmatpush2.msra.mxu0 0.0
        %1174 = vmatprep.subr.mxu0 0.0
        %1175 = vmatpush2.msra.mxu0 0.0
        %1176 = vmatprep.subr.mxu0 0.0
        %1177 = vmatpush2.msra.mxu0 0.0
        %1178 = vmatprep.subr.mxu0 0.0
        %1179 = vmatpush2.msra.mxu0 0.0
        %1180 = vmatprep.subr.mxu0 0.0
        %1181 = vmatpush2.msra.mxu0 0.0
        %1182 = vmatprep.subr.mxu0 0.0
        %1183 = vmatpush2.msra.mxu0 0.0
        %1184 = vmatprep.subr.mxu0 0.0
        %1185 = vmatpush2.msra.mxu0 0.0
        %1186 = vmatprep.subr.mxu0 0.0
        %1187 = vmatpush2.msra.mxu0 0.0
        %1188 = vmatprep.subr.mxu0 0.0
        %1189 = vmatpush2.msra.mxu0 0.0
        %1190 = vmatprep.subr.mxu0 0.0
        %1191 = vmatpush2.msra.mxu0 0.0
        %1192 = vmatprep.subr.mxu0 0.0
        %1193 = vmatpush2.msra.mxu0 0.0
        %1194 = vmatprep.subr.mxu0 0.0
        %1195 = vmatpush2.msra.mxu0 0.0
        %1196 = vmatprep.mubr.f32.mxu0 0.0
        %1197 = vmatmul.mubr.f32.gmra.mxu0 %v502
        %v1198 = vpop.f32.mrf.mxu0
        %v1199 = vadd.f32 %v1131, %v1198
        %v1200 = vpop.f32.mrf.mxu0
        %1201 = vdwg.mxu0
        %v1202 = vadd.f32 %v1123, %v1199
        %v1203 = vxor.u32 %v1202, 2147483648
        %v1204 = vmul.f32 %v1203, 1.442695
        %v1205 = vpow.pop %v1204
        %v1206 = vadd.f32 %v1205, 1.0
        %v1207 = vrcp.pop %v1206
        %v1208 = vmul.f32 1.0, %v1207
        %1210 = vrot.lane.b32.xlu0 %v1199, 64
        %v1211 = vpop.permute.xlu0 %1210
        %v1213 = vmul.f32 %v1208, %v1211
        %1215 = vrot.lane.b32.xlu0 %v1213, 64
        %v1216 = vpop.permute.xlu0 %1215
        %v1218 = vadd.f32 %v1123, %v1216
        %v1219 = vtanh.pop %v1218
        %v1220 = vsub.f32 1.0, %v1208
        %1222 = vrot.lane.b32.xlu0 %v1219, 96
        %v1223 = vpop.permute.xlu0 %1222
        %v1225 = vmul.f32 %v1220, %v1223
        %1226 = vrot.lane.b32.xlu0 %v439, 32
        %v1227 = vpop.permute.xlu0 %1226
        %v1229 = vmul.f32 %v1208, %v1227
        %v1230 = vadd.f32 %v1225, %v1229
        %1232 = vrot.lane.b32.xlu0 %v1230, 96
        %v1233 = vpop.permute.xlu0 %1232
        %1235 = vst.msk [vmem:[#allocation2] sm:$0xf] %vm714, %v1233
        %1236 = vst.msk [vmem:[#allocation8] sm:$0xf] %vm714, %v1233
        %v1237 = vld [vmem:[%s10] sm:$0xff]
        %v1238 = vld [vmem:[%s10 + $0x8] sm:$0xff]
        %v1239 = vld [vmem:[%s10 + $0x10] sm:$0xff]
        %v1240 = vld [vmem:[%s10 + $0x18] sm:$0xff]
        %v1241 = vld [vmem:[%s10 + $0x20] sm:$0xff]
        %v1242 = vld [vmem:[%s10 + $0x28] sm:$0xff]
        %v1243 = vld [vmem:[%s10 + $0x30] sm:$0xff]
        %v1244 = vld [vmem:[%s10 + $0x38] sm:$0xff]
        %v1245 = vld [vmem:[%s10 + $0x40] sm:$0xff]
        %v1246 = vld [vmem:[%s10 + $0x48] sm:$0xff]
        %1247 = vmatprep.subr.mxu0 0.0
        %1248 = vmatpush1.msra.mxu0 0.0
        %1249 = vmatprep.subr.mxu0 0.0
        %1250 = vmatpush1.msra.mxu0 0.0
        %1251 = vmatprep.subr.mxu0 0.0
        %1252 = vmatpush1.msra.mxu0 0.0
        %1253 = vmatprep.subr.mxu0 0.0
        %1254 = vmatpush1.msra.mxu0 0.0
        %1255 = vmatprep.subr.mxu0 0.0
        %1256 = vmatpush1.msra.mxu0 0.0
        %1257 = vmatprep.subr.mxu0 0.0
        %1258 = vmatpush1.msra.mxu0 0.0
        %1259 = vmatprep.subr.mxu0 0.0
        %1260 = vmatpush1.msra.mxu0 0.0
        %1261 = vmatprep.subr.mxu0 0.0
        %1262 = vmatpush1.msra.mxu0 0.0
        %1263 = vmatprep.subr.mxu0 0.0
        %1264 = vmatpush1.msra.mxu0 0.0
        %1265 = vmatprep.subr.mxu0 0.0
        %1266 = vmatpush1.msra.mxu0 0.0
        %1267 = vmatprep.subr.mxu0 0.0
        %1268 = vmatpush1.msra.mxu0 0.0
        %1269 = vmatprep.subr.mxu0 0.0
        %1270 = vmatpush1.msra.mxu0 0.0
        %1271 = vmatprep.subr.mxu0 0.0
        %1272 = vmatpush1.msra.mxu0 %v1244
        %1273 = vmatprep.subr.mxu0 0.0
        %1274 = vmatpush1.msra.mxu0 %v1243
        %1275 = vmatprep.subr.mxu0 0.0
        %1276 = vmatpush1.msra.mxu0 %v1242
        %1277 = vmatprep.subr.mxu0 0.0
        %1278 = vmatpush1.msra.mxu0 %v1241
        %1279 = vmatprep.subr.mxu0 0.0
        %1280 = vmatpush2.msra.mxu0 0.0
        %1281 = vmatprep.subr.mxu0 0.0
        %1282 = vmatpush2.msra.mxu0 0.0
        %1283 = vmatprep.subr.mxu0 0.0
        %1284 = vmatpush2.msra.mxu0 0.0
        %1285 = vmatprep.subr.mxu0 0.0
        %1286 = vmatpush2.msra.mxu0 0.0
        %1287 = vmatprep.subr.mxu0 0.0
        %1288 = vmatpush2.msra.mxu0 0.0
        %1289 = vmatprep.subr.mxu0 0.0
        %1290 = vmatpush2.msra.mxu0 0.0
        %1291 = vmatprep.subr.mxu0 0.0
        %1292 = vmatpush2.msra.mxu0 0.0
        %1293 = vmatprep.subr.mxu0 0.0
        %1294 = vmatpush2.msra.mxu0 0.0
        %1295 = vmatprep.subr.mxu0 0.0
        %1296 = vmatpush2.msra.mxu0 0.0
        %1297 = vmatprep.subr.mxu0 0.0
        %1298 = vmatpush2.msra.mxu0 0.0
        %1299 = vmatprep.subr.mxu0 0.0
        %1300 = vmatpush2.msra.mxu0 0.0
        %1301 = vmatprep.subr.mxu0 0.0
        %1302 = vmatpush2.msra.mxu0 0.0
        %1303 = vmatprep.subr.mxu0 0.0
        %1304 = vmatpush2.msra.mxu0 0.0
        %1305 = vmatprep.subr.mxu0 0.0
        %1306 = vmatpush2.msra.mxu0 0.0
        %1307 = vmatprep.subr.mxu0 0.0
        %1308 = vmatpush2.msra.mxu0 0.0
        %1309 = vmatprep.subr.mxu0 0.0
        %1310 = vmatpush2.msra.mxu0 0.0
        %1311 = vmatprep.mubr.f32.mxu0 0.0
        %1312 = vmatmul.mubr.f32.gmra.mxu0 %v973
        %v1313 = vpop.f32.mrf.mxu0
        %v1314 = vadd.f32 0.0, %v1313
        %v1315 = vpop.f32.mrf.mxu0
        %1316 = vdwg.mxu0
        %v1317 = vsel %vm500, %v1233, 0
        %1319 = vmatprep.subr.mxu0 0.0
        %1320 = vmatpush1.msra.mxu0 0.0
        %1321 = vmatprep.subr.mxu0 0.0
        %1322 = vmatpush1.msra.mxu0 0.0
        %1323 = vmatprep.subr.mxu0 0.0
        %1324 = vmatpush1.msra.mxu0 0.0
        %1325 = vmatprep.subr.mxu0 0.0
        %1326 = vmatpush1.msra.mxu0 0.0
        %1327 = vmatprep.subr.mxu0 0.0
        %1328 = vmatpush1.msra.mxu0 0.0
        %1329 = vmatprep.subr.mxu0 0.0
        %1330 = vmatpush1.msra.mxu0 0.0
        %1331 = vmatprep.subr.mxu0 0.0
        %1332 = vmatpush1.msra.mxu0 0.0
        %1333 = vmatprep.subr.mxu0 0.0
        %1334 = vmatpush1.msra.mxu0 0.0
        %1335 = vmatprep.subr.mxu0 0.0
        %1336 = vmatpush1.msra.mxu0 0.0
        %1337 = vmatprep.subr.mxu0 0.0
        %1338 = vmatpush1.msra.mxu0 0.0
        %1339 = vmatprep.subr.mxu0 0.0
        %1340 = vmatpush1.msra.mxu0 0.0
        %1341 = vmatprep.subr.mxu0 0.0
        %1342 = vmatpush1.msra.mxu0 0.0
        %1343 = vmatprep.subr.mxu0 0.0
        %1344 = vmatpush1.msra.mxu0 %v1240
        %1345 = vmatprep.subr.mxu0 0.0
        %1346 = vmatpush1.msra.mxu0 %v1239
        %1347 = vmatprep.subr.mxu0 0.0
        %1348 = vmatpush1.msra.mxu0 %v1238
        %1349 = vmatprep.subr.mxu0 0.0
        %1350 = vmatpush1.msra.mxu0 %v1237
        %1351 = vmatprep.subr.mxu0 0.0
        %1352 = vmatpush2.msra.mxu0 0.0
        %1353 = vmatprep.subr.mxu0 0.0
        %1354 = vmatpush2.msra.mxu0 0.0
        %1355 = vmatprep.subr.mxu0 0.0
        %1356 = vmatpush2.msra.mxu0 0.0
        %1357 = vmatprep.subr.mxu0 0.0
        %1358 = vmatpush2.msra.mxu0 0.0
        %1359 = vmatprep.subr.mxu0 0.0
        %1360 = vmatpush2.msra.mxu0 0.0
        %1361 = vmatprep.subr.mxu0 0.0
        %1362 = vmatpush2.msra.mxu0 0.0
        %1363 = vmatprep.subr.mxu0 0.0
        %1364 = vmatpush2.msra.mxu0 0.0
        %1365 = vmatprep.subr.mxu0 0.0
        %1366 = vmatpush2.msra.mxu0 0.0
        %1367 = vmatprep.subr.mxu0 0.0
        %1368 = vmatpush2.msra.mxu0 0.0
        %1369 = vmatprep.subr.mxu0 0.0
        %1370 = vmatpush2.msra.mxu0 0.0
        %1371 = vmatprep.subr.mxu0 0.0
        %1372 = vmatpush2.msra.mxu0 0.0
        %1373 = vmatprep.subr.mxu0 0.0
        %1374 = vmatpush2.msra.mxu0 0.0
        %1375 = vmatprep.subr.mxu0 0.0
        %1376 = vmatpush2.msra.mxu0 0.0
        %1377 = vmatprep.subr.mxu0 0.0
        %1378 = vmatpush2.msra.mxu0 0.0
        %1379 = vmatprep.subr.mxu0 0.0
        %1380 = vmatpush2.msra.mxu0 0.0
        %1381 = vmatprep.subr.mxu0 0.0
        %1382 = vmatpush2.msra.mxu0 0.0
        %1383 = vmatprep.mubr.f32.mxu0 0.0
        %1384 = vmatmul.mubr.f32.gmra.mxu0 %v1317
        %v1385 = vpop.f32.mrf.mxu0
        %v1386 = vadd.f32 %v1314, %v1385
        %v1387 = vpop.f32.mrf.mxu0
        %1388 = vdwg.mxu0
        %1389 = vmatprep.subr.mxu0 0.0
        %1390 = vmatpush1.msra.mxu0 0.0
        %1391 = vmatprep.subr.mxu0 0.0
        %1392 = vmatpush1.msra.mxu0 0.0
        %1393 = vmatprep.subr.mxu0 0.0
        %1394 = vmatpush1.msra.mxu0 0.0
        %1395 = vmatprep.subr.mxu0 0.0
        %1396 = vmatpush1.msra.mxu0 0.0
        %1397 = vmatprep.subr.mxu0 0.0
        %1398 = vmatpush1.msra.mxu0 0.0
        %1399 = vmatprep.subr.mxu0 0.0
        %1400 = vmatpush1.msra.mxu0 0.0
        %1401 = vmatprep.subr.mxu0 0.0
        %1402 = vmatpush1.msra.mxu0 0.0
        %1403 = vmatprep.subr.mxu0 0.0
        %1404 = vmatpush1.msra.mxu0 0.0
        %1405 = vmatprep.subr.mxu0 0.0
        %1406 = vmatpush1.msra.mxu0 0.0
        %1407 = vmatprep.subr.mxu0 0.0
        %1408 = vmatpush1.msra.mxu0 0.0
        %1409 = vmatprep.subr.mxu0 0.0
        %1410 = vmatpush1.msra.mxu0 0.0
        %1411 = vmatprep.subr.mxu0 0.0
        %1412 = vmatpush1.msra.mxu0 0.0
        %1413 = vmatprep.subr.mxu0 0.0
        %1414 = vmatpush1.msra.mxu0 0.0
        %1415 = vmatprep.subr.mxu0 0.0
        %1416 = vmatpush1.msra.mxu0 0.0
        %1417 = vmatprep.subr.mxu0 0.0
        %1418 = vmatpush1.msra.mxu0 %v1246
        %1419 = vmatprep.subr.mxu0 0.0
        %1420 = vmatpush1.msra.mxu0 %v1245
        %1421 = vmatprep.subr.mxu0 0.0
        %1422 = vmatpush2.msra.mxu0 0.0
        %1423 = vmatprep.subr.mxu0 0.0
        %1424 = vmatpush2.msra.mxu0 0.0
        %1425 = vmatprep.subr.mxu0 0.0
        %1426 = vmatpush2.msra.mxu0 0.0
        %1427 = vmatprep.subr.mxu0 0.0
        %1428 = vmatpush2.msra.mxu0 0.0
        %1429 = vmatprep.subr.mxu0 0.0
        %1430 = vmatpush2.msra.mxu0 0.0
        %1431 = vmatprep.subr.mxu0 0.0
        %1432 = vmatpush2.msra.mxu0 0.0
        %1433 = vmatprep.subr.mxu0 0.0
        %1434 = vmatpush2.msra.mxu0 0.0
        %1435 = vmatprep.subr.mxu0 0.0
        %1436 = vmatpush2.msra.mxu0 0.0
        %1437 = vmatprep.subr.mxu0 0.0
        %1438 = vmatpush2.msra.mxu0 0.0
        %1439 = vmatprep.subr.mxu0 0.0
        %1440 = vmatpush2.msra.mxu0 0.0
        %1441 = vmatprep.subr.mxu0 0.0
        %1442 = vmatpush2.msra.mxu0 0.0
        %1443 = vmatprep.subr.mxu0 0.0
        %1444 = vmatpush2.msra.mxu0 0.0
        %1445 = vmatprep.subr.mxu0 0.0
        %1446 = vmatpush2.msra.mxu0 0.0
        %1447 = vmatprep.subr.mxu0 0.0
        %1448 = vmatpush2.msra.mxu0 0.0
        %1449 = vmatprep.subr.mxu0 0.0
        %1450 = vmatpush2.msra.mxu0 0.0
        %1451 = vmatprep.subr.mxu0 0.0
        %1452 = vmatpush2.msra.mxu0 0.0
        %1453 = vmatprep.mubr.f32.mxu0 0.0
        %1454 = vmatmul.mubr.f32.gmra.mxu0 %v1047
        %v1455 = vpop.f32.mrf.mxu0
        %v1456 = vadd.f32 0.0, %v1455
        %v1457 = vpop.f32.mrf.mxu0
        %1458 = vdwg.mxu0
        %v1459 = vadd.f32 %v1386, %v1456
        %v1460 = vld [vmem:[%s11] sm:$0x1]
        %v1462 = vlaneseq
        %v1463 = vshrl.u32 %v1462, 7
        %v1464 = vsub.s32 0, %v1463
        %v1465 = vrot.slane %v1460, %v1464
        %v1467 = vadd.f32 %v1459, %v1465
        %1468 = vst.msk [vmem:[%s422] sm:$0xf] %vm714, %v1467
        %s1469 = sand.u32 %s36, 1
        %s1470 = scalar_lea.sflag [#allocation7], %s1469
        %s1471 = sand.u32 %s275, 1
        %s1472 = smul.addr %s1471, 4
        %s1473 = scalar_lea.vmem [#allocation6], %s1472
        %s1474 = sand.u32 %s36, 1
        %s1475 = scalar_lea.sflag [#allocation7], %s1474
        %s1476 = sand.u32 %s322, 1
        %s1477 = smul.addr %s1476, 4
        %s1478 = scalar_lea.vmem [#allocation10], %s1477
        // Predicated region
        $region69: #{decoder_decode.1} parent=63 // pred_check
          %p1479 = pneg %p285
        $region70: #{decoder_decode.1} parent=63 // pred_check_branch
          %1481 = sbr.rel (%p1479) target = $region72
        $region71: #{decoder_decode.1} parent=63 // pred_region
          %s1483 = ssub.s32 64, 64
          %1484 = vsyncadd %s1470, %s1483
          %s1485 = smul.addr %s36, 64
          %s1486 = scalar_lea.hbm %s12, %s1485
          %s1488 = sshll.u32 %s1473, 4
          %s1489 = int_to_ptr.vmem [resolvable:$true] %s1488
          %1491 = dma.vmem_to_hbm [thread:$0]  %s1489, 64, %s1486, %s1470
        $region72: #{decoder_decode.1} parent=63 // pred_fallthru
          _
        // Predicated region
        $region73: #{decoder_decode.1} parent=63 // pred_check
          %p1492 = pneg %p306
        $region74: #{decoder_decode.1} parent=63 // pred_check_branch
          %1494 = sbr.rel (%p1492) target = $region76
        $region75: #{decoder_decode.1} parent=63 // pred_region
          %s1496 = ssub.s32 64, 64
          %1497 = vsyncadd [#allocation9], %s1496
          %s1499 = sshll.u32 [#allocation8], 4
          %s1500 = int_to_ptr.vmem [resolvable:$true] %s1499
          %1502 = dma.vmem_to_hbm [thread:$0]  %s1500, 64, %s13, [#allocation9]
        $region76: #{decoder_decode.1} parent=63 // pred_fallthru
          _
        // Predicated region
        $region77: #{decoder_decode.1} parent=63 // pred_check
          %p1503 = pneg %p332
        $region78: #{decoder_decode.1} parent=63 // pred_check_branch
          %1505 = sbr.rel (%p1503) target = $region80
        $region79: #{decoder_decode.1} parent=63 // pred_region
          %s1507 = ssub.s32 64, 64
          %1508 = vsyncadd %s1475, %s1507
          %s1509 = smul.addr %s36, 64
          %s1510 = scalar_lea.hbm %s14, %s1509
          %s1512 = sshll.u32 %s1478, 4
          %s1513 = int_to_ptr.vmem [resolvable:$true] %s1512
          %1515 = dma.vmem_to_hbm [thread:$0]  %s1513, 64, %s1510, %s1475
        $region80: #{decoder_decode.1} parent=63 // pred_fallthru
          _
        // Predicated region
        $region81: #{decoder_decode.1} parent=63 // pred_check
          %p1516 = pneg %p306
        $region82: #{decoder_decode.1} parent=63 // pred_check_branch
          %1518 = sbr.rel (%p1516) target = $region84
        $region83: #{decoder_decode.1} parent=63 // pred_region
          %1519 = dma.done [#allocation9], 64
        $region84: #{decoder_decode.1} parent=63 // pred_fallthru
          _
      $region64: #{decoder_decode.1} parent=5 // pred_fallthru
        _
      %p1520 = scmp.le.s32.totalorder 2, %s31
      // Predicated region
      $region85: #{decoder_decode.1} parent=5 // pred_check
        %p1521 = pneg %p1520
      $region86: #{decoder_decode.1} parent=5 // pred_check_branch
        %1523 = sbr.rel (%p1521) target = $region88
      $region87: #{decoder_decode.1} parent=5 // pred_region
        %s1524 = ssub.s32 %s31, 2
        // Predicated region
        $region89: #{decoder_decode.1} parent=87 // pred_check
          %p1525 = pneg %p291
        $region90: #{decoder_decode.1} parent=87 // pred_check_branch
          %1527 = sbr.rel (%p1525) target = $region92
        $region91: #{decoder_decode.1} parent=87 // pred_region
          %s1528 = sand.u32 %s37, 1
          %s1529 = scalar_lea.sflag [#allocation7], %s1528
          %s1530 = sand.u32 %s276, 1
          %s1531 = smul.addr %s1530, 4
          %s1532 = scalar_lea.vmem [#allocation6], %s1531
          %1533 = dma.done %s1529, 64
        $region92: #{decoder_decode.1} parent=87 // pred_fallthru
          _
        // Predicated region
        $region93: #{decoder_decode.1} parent=87 // pred_check
          %p1534 = pneg %p338
        $region94: #{decoder_decode.1} parent=87 // pred_check_branch
          %1536 = sbr.rel (%p1534) target = $region96
        $region95: #{decoder_decode.1} parent=87 // pred_region
          %s1537 = sand.u32 %s37, 1
          %s1538 = scalar_lea.sflag [#allocation7], %s1537
          %s1539 = sand.u32 %s323, 1
          %s1540 = smul.addr %s1539, 4
          %s1541 = scalar_lea.vmem [#allocation10], %s1540
          %1542 = dma.done %s1538, 64
        $region96: #{decoder_decode.1} parent=87 // pred_fallthru
          _
      $region88: #{decoder_decode.1} parent=5 // pred_fallthru
        _
    $region6: #{decoder_decode.1} parent=1 // loop_footer
      %s35 = sadd.s32 1, %s31
    $region7: #{decoder_decode.1} parent=1 // loop_footer_branch
      %30 = sbr.rel target = $region3
    $region8: #{decoder_decode.1} parent=1 // loop_exit
      _
    %1543 = vsyncpa [#allocation7], 1
    %s1544 = scalar_lea.sflag [#allocation7], 1
    %1545 = vsyncpa %s1544, 1
    %1546 = vsyncpa [#allocation9], 1

</llo_original>
